<compile_context>
chip_gen: v6e
topology: v6e:2x2x1
jax: 0.10.0
libtpu: 0.0.40
codegen_flags: <defaults>
</compile_context>

<pallas_src>
import jax
import jax.numpy as jnp
from jax import lax
from jax.experimental import pallas as pl
from jax.experimental.pallas import tpu as pltpu

BN_EPS = 1e-5
LANE = 128


def _round_up(x, m):
    return -(-x // m) * m


def _largest_divisor_leq(n, cap):
    for d in range(min(n, cap), 0, -1):
        if n % d == 0:
            return d
    return 1


def _pick_tile_h(h, w, cin, cout_p, target_rows=512, vmem_budget=8 << 20):
    """Largest divisor of H whose haloed tile fits a conservative VMEM budget.

    The ~8 MiB budget (double-buffered input + conv-out tiles + resident bf16
    weights) is safe on every generation, including v7x's 64 MiB VMEM.
    """
    fallback = None
    for th in range(h, 0, -1):
        if h % th or (th * w) % 8:
            continue
        rows = th * w
        vmem = (2 * (th + 2) * (w + 2) * cin * 4   # double-buffered haloed input tile (f32)
                + 2 * rows * cout_p * 4            # double-buffered conv-out tile (f32)
                + 9 * cin * cout_p * 2             # resident bf16 weight taps
                + 2 * 2 * cout_p * 4)              # per-tile stats block
        if vmem > vmem_budget:
            continue
        if rows <= target_rows:
            return th
        fallback = th
    if fallback is not None:
        return fallback
    raise ValueError("no valid tile_h: need tile_h | H and (tile_h * W) % 8 == 0")


def conv_norm_act(x, weight, bias, gamma, beta, *, tile_h=None):
    """Conv2d(3x3, padding='same', stride 1) -> BatchNorm2d (train-mode stats) -> ReLU.

    x: (N, Cin, H, W) f32.  weight: (Cout, Cin, 3, 3).  bias/gamma/beta: (Cout,).
    Returns (N, Cout, H, W) f32.

    The conv bias is exactly cancelled by the BatchNorm mean subtraction (and does
    not affect the variance), so it is not sent to the kernel.
    """
    del bias
    n, cin, h, w = x.shape
    cout, cin_w, kh, kw = weight.shape
    assert (kh, kw) == (3, 3) and cin_w == cin

    cout_p = _round_up(cout, LANE)            # lane-dense output / MXU columns
    if tile_h is None:
        tile_h = _pick_tile_h(h, w, cin, cout_p)
    assert h % tile_h == 0, "tile_h must divide H"
    ht = h // tile_h
    tile_m = tile_h * w
    assert tile_m % 8 == 0, "tile_h * W must be a multiple of 8 (sublane tiling)"
    num_tiles = n * ht
    m_total = num_tiles * tile_m              # == N * H * W (no row padding)
    hp, wp = tile_h + 2, w + 2

    # ---- glue: NCHW -> NHWC, 'same' pad, overlapping (haloed) H-tiles ----
    x_nhwc = jnp.transpose(x, (0, 2, 3, 1)).astype(jnp.float32)
    x_pad = jnp.pad(x_nhwc, ((0, 0), (1, 1), (1, 1), (0, 0)))
    x_tiles = jnp.stack(
        [x_pad[:, t * tile_h:t * tile_h + hp] for t in range(ht)], axis=1
    ).reshape(num_tiles, hp, wp, cin)

    # Weight taps: index (dy*3 + dx, ci, co) == weight[co, ci, dy, dx]; pad co -> cout_p.
    w_taps = jnp.transpose(weight, (2, 3, 1, 0)).reshape(9, cin, cout)
    w_taps = jnp.pad(w_taps, ((0, 0), (0, 0), (0, cout_p - cout))).astype(jnp.bfloat16)

    # ---------------- phase 1: conv tile + per-tile BN partial stats ----------------
    def conv_stats_kernel(x_ref, w_ref, y_ref, stats_ref):
        x_t = x_ref[0]                    # (hp, wp, cin)  f32 haloed input tile
        w_all = w_ref[...]                # (9, cin, cout_p) bf16, resident
        acc = jnp.zeros((tile_m, cout_p), jnp.float32)
        # 3x3 conv as 9 shifted tap-matmuls on the MXU (bf16 operands, f32 accumulate).
        for dy in range(3):
            for dx in range(3):
                patch = x_t[dy:dy + tile_h, dx:dx + w, :]          # (tile_h, w, cin)
                lhs = patch.reshape(tile_m, cin).astype(jnp.bfloat16)
                acc = acc + jnp.dot(lhs, w_all[3 * dy + dx],
                                    preferred_element_type=jnp.float32)
        y_ref[...] = acc                                           # raw conv output (f32)
        s = jnp.sum(acc, axis=0, keepdims=True)                    # per-channel sum
        ss = jnp.sum(acc * acc, axis=0, keepdims=True)             # per-channel sum of squares
        stats_ref[...] = jnp.concatenate([s, ss], axis=0).reshape(1, 2, cout_p)

    flops = 2 * m_total * (9 * cin) * cout_p
    bytes_accessed = (x_tiles.size * 4 + w_taps.size * 2
                      + m_total * cout_p * 4 + num_tiles * 2 * cout_p * 4)

    y_conv, stats = pl.pallas_call(
        conv_stats_kernel,
        grid=(num_tiles,),
        in_specs=[
            pl.BlockSpec((1, hp, wp, cin), lambda i: (i, 0, 0, 0)),    # haloed input tile
            pl.BlockSpec((9, cin, cout_p), lambda i: (0, 0, 0)),       # resident weights
        ],
        out_specs=[
            pl.BlockSpec((tile_m, cout_p), lambda i: (i, 0)),          # conv output tile
            pl.BlockSpec((1, 2, cout_p), lambda i: (i, 0, 0)),         # per-tile stats
        ],
        out_shape=(
            jax.ShapeDtypeStruct((m_total, cout_p), jnp.float32),
            jax.ShapeDtypeStruct((num_tiles, 2, cout_p), jnp.float32),
        ),
        compiler_params=pltpu.CompilerParams(dimension_semantics=("parallel",)),
        cost_estimate=pl.CostEstimate(flops=flops, transcendentals=0,
                                      bytes_accessed=bytes_accessed),
    )(x_tiles, w_taps)

    # ---- finalize BN stats: tiny (Cout_p,)-sized computation (E[x^2] - E[x]^2) ----
    m_real = float(n * h * w)
    s = jnp.sum(stats[:, 0, :], axis=0)
    ss = jnp.sum(stats[:, 1, :], axis=0)
    mean = s / m_real
    var = jnp.maximum(ss / m_real - mean * mean, 0.0)
    inv = lax.rsqrt(var + BN_EPS)
    gamma_p = jnp.pad(gamma.astype(jnp.float32), (0, cout_p - cout))   # padded chans -> 0
    beta_p = jnp.pad(beta.astype(jnp.float32), (0, cout_p - cout))
    scale = (gamma_p * inv).reshape(1, cout_p)
    shift = (beta_p - mean * gamma_p * inv).reshape(1, cout_p)

    # ---------------- phase 2: normalize + affine + ReLU (lane-dense) ----------------
    tile_m2 = tile_m * _largest_divisor_leq(num_tiles, max(1, 2048 // tile_m))

    def bn_relu_kernel(y_ref, scale_ref, shift_ref, o_ref):
        o_ref[...] = jnp.maximum(y_ref[...] * scale_ref[...] + shift_ref[...], 0.0)

    out_flat = pl.pallas_call(
        bn_relu_kernel,
        grid=(m_total // tile_m2,),
        in_specs=[
            pl.BlockSpec((tile_m2, cout_p), lambda i: (i, 0)),
            pl.BlockSpec((1, cout_p), lambda i: (0, 0)),
            pl.BlockSpec((1, cout_p), lambda i: (0, 0)),
        ],
        out_specs=pl.BlockSpec((tile_m2, cout_p), lambda i: (i, 0)),
        out_shape=jax.ShapeDtypeStruct((m_total, cout_p), jnp.float32),
        compiler_params=pltpu.CompilerParams(dimension_semantics=("parallel",)),
    )(y_conv, scale, shift)

    # ---- glue: drop channel padding, rows -> (N, H, W, Cout) -> NCHW ----
    # TODO(synk): if the surrounding model can consume NHWC, return before this transpose
    # to save one full HBM round-trip of the output tensor.
    out = out_flat[:, :cout].reshape(n, ht, tile_h, w, cout)
    return jnp.transpose(out, (0, 4, 1, 2, 3)).reshape(n, cout, h, w)


def _reference(x, weight, bias, gamma, beta):
    y = lax.conv_general_dilated(
        x, weight, window_strides=(1, 1), padding=((1, 1), (1, 1)),
        dimension_numbers=("NCHW", "OIHW", "NCHW"))
    y = y + bias.reshape(1, -1, 1, 1)
    mean = jnp.mean(y, axis=(0, 2, 3), keepdims=True)
    var = jnp.mean((y - mean) ** 2, axis=(0, 2, 3), keepdims=True)
    y = (y - mean) * lax.rsqrt(var + BN_EPS)
    y = y * gamma.reshape(1, -1, 1, 1) + beta.reshape(1, -1, 1, 1)
    return jnp.maximum(y, 0.0)


if __name__ == "__main__":
    key = jax.random.PRNGKey(0)
    k1, k2, k3 = jax.random.split(key, 3)

    N, C_IN, C_OUT, H, W = 2, 4, 8, 16, 16

    x = jax.random.normal(k1, (N, C_IN, H, W), dtype=jnp.float32)

    # Deterministic parameter init (Conv2d-like uniform, BN defaults gamma=1, beta=0).
    fan_in = C_IN * 3 * 3
    bound = 1.0 / (fan_in ** 0.5)
    weight = jax.random.uniform(k2, (C_OUT, C_IN, 3, 3), jnp.float32, -bound, bound)
    bias = jax.random.uniform(k3, (C_OUT,), jnp.float32, -bound, bound)
    gamma = jnp.ones((C_OUT,), jnp.float32)
    beta = jnp.zeros((C_OUT,), jnp.float32)

    # tile_h=8 -> 4 grid tiles (2 per image) so the haloed-tile / pipelined path is exercised.
    out = jax.block_until_ready(conv_norm_act(x, weight, bias, gamma, beta, tile_h=8))
    ref = _reference(x, weight, bias, gamma, beta)

    assert out.shape == (N, C_OUT, H, W)
    assert bool(jnp.isfinite(out).all())
    # bf16 MXU operands (f32 accumulation) -> slightly looser tolerance than pure f32.
    assert jnp.allclose(out, ref, atol=3e-2, rtol=3e-2), float(jnp.max(jnp.abs(out - ref)))
    print("KERNEL_OK")
</pallas_src>

<mosaic_0001>
module attributes {stable_mosaic.version = 11 : i64} {
  func.func @conv_stats_kernel(%arg0: i32, %arg1: memref<1x10x18x4xf32, #tpu.memory_space<vmem>>, %arg2: memref<9x4x128xbf16, #tpu.memory_space<vmem>>, %arg3: memref<128x128xf32, #tpu.memory_space<vmem>>, %arg4: memref<1x2x128xf32, #tpu.memory_space<vmem>>) attributes {dimension_semantics = [#tpu.dimension_semantics<parallel>], iteration_bounds = array<i64: 4>, scalar_prefetch = 0 : i64, scratch_operands = 0 : i64, tpu.core_type = #tpu.core_type<tc>, window_params = [{transform_indices = @transform_0, window_bounds = array<i64: 1, 10, 18, 4>}, {pipeline_mode = #tpu.pipeline_mode<synchronous>, transform_indices = @transform_1, window_bounds = array<i64: 9, 4, 128>}, {transform_indices = @transform_2, window_bounds = array<i64: 128, 128>}, {transform_indices = @transform_3, window_bounds = array<i64: 1, 2, 128>}]} {
    %c0 = arith.constant 0 : index
    %c0_0 = arith.constant 0 : index
    %c0_1 = arith.constant 0 : index
    %c0_2 = arith.constant 0 : index
    %0 = vector.load %arg1[%c0, %c0_0, %c0_1, %c0_2] : memref<1x10x18x4xf32, #tpu.memory_space<vmem>>, vector<1x10x18x4xf32>
    %1 = vector.shape_cast %0 : vector<1x10x18x4xf32> to vector<10x18x4xf32>
    %c0_3 = arith.constant 0 : index
    %c0_4 = arith.constant 0 : index
    %c0_5 = arith.constant 0 : index
    %2 = vector.load %arg2[%c0_3, %c0_4, %c0_5] : memref<9x4x128xbf16, #tpu.memory_space<vmem>>, vector<9x4x128xbf16>
    %cst = arith.constant 0.000000e+00 : f32
    %3 = vector.broadcast %cst : f32 to vector<128x128xf32>
    %4 = vector.extract_strided_slice %1 {offsets = [0, 0, 0], sizes = [8, 16, 4], strides = [1, 1, 1]} : vector<10x18x4xf32> to vector<8x16x4xf32>
    %5 = vector.shape_cast %4 : vector<8x16x4xf32> to vector<128x4xf32>
    %6 = arith.truncf %5 : vector<128x4xf32> to vector<128x4xbf16>
    %7 = vector.extract_strided_slice %2 {offsets = [0, 0, 0], sizes = [1, 4, 128], strides = [1, 1, 1]} : vector<9x4x128xbf16> to vector<1x4x128xbf16>
    %8 = vector.shape_cast %7 : vector<1x4x128xbf16> to vector<4x128xbf16>
    %cst_6 = arith.constant dense<0.000000e+00> : vector<128x128xf32>
    %9 = tpu.matmul %6, %8, %cst_6 {dimension_numbers = #tpu.dot_dimension_numbers<[1], [0], [0], [1], [0, 0, 1, 1], [], []>} : vector<128x4xbf16>, vector<4x128xbf16>, vector<128x128xf32> -> vector<128x128xf32>
    %10 = arith.addf %3, %9 : vector<128x128xf32>
    %11 = vector.extract_strided_slice %1 {offsets = [0, 1, 0], sizes = [8, 16, 4], strides = [1, 1, 1]} : vector<10x18x4xf32> to vector<8x16x4xf32>
    %12 = vector.shape_cast %11 : vector<8x16x4xf32> to vector<128x4xf32>
    %13 = arith.truncf %12 : vector<128x4xf32> to vector<128x4xbf16>
    %14 = vector.extract_strided_slice %2 {offsets = [1, 0, 0], sizes = [1, 4, 128], strides = [1, 1, 1]} : vector<9x4x128xbf16> to vector<1x4x128xbf16>
    %15 = vector.shape_cast %14 : vector<1x4x128xbf16> to vector<4x128xbf16>
    %cst_7 = arith.constant dense<0.000000e+00> : vector<128x128xf32>
    %16 = tpu.matmul %13, %15, %cst_7 {dimension_numbers = #tpu.dot_dimension_numbers<[1], [0], [0], [1], [0, 0, 1, 1], [], []>} : vector<128x4xbf16>, vector<4x128xbf16>, vector<128x128xf32> -> vector<128x128xf32>
    %17 = arith.addf %10, %16 : vector<128x128xf32>
    %18 = vector.extract_strided_slice %1 {offsets = [0, 2, 0], sizes = [8, 16, 4], strides = [1, 1, 1]} : vector<10x18x4xf32> to vector<8x16x4xf32>
    %19 = vector.shape_cast %18 : vector<8x16x4xf32> to vector<128x4xf32>
    %20 = arith.truncf %19 : vector<128x4xf32> to vector<128x4xbf16>
    %21 = vector.extract_strided_slice %2 {offsets = [2, 0, 0], sizes = [1, 4, 128], strides = [1, 1, 1]} : vector<9x4x128xbf16> to vector<1x4x128xbf16>
    %22 = vector.shape_cast %21 : vector<1x4x128xbf16> to vector<4x128xbf16>
    %cst_8 = arith.constant dense<0.000000e+00> : vector<128x128xf32>
    %23 = tpu.matmul %20, %22, %cst_8 {dimension_numbers = #tpu.dot_dimension_numbers<[1], [0], [0], [1], [0, 0, 1, 1], [], []>} : vector<128x4xbf16>, vector<4x128xbf16>, vector<128x128xf32> -> vector<128x128xf32>
    %24 = arith.addf %17, %23 : vector<128x128xf32>
    %25 = vector.extract_strided_slice %1 {offsets = [1, 0, 0], sizes = [8, 16, 4], strides = [1, 1, 1]} : vector<10x18x4xf32> to vector<8x16x4xf32>
    %26 = vector.shape_cast %25 : vector<8x16x4xf32> to vector<128x4xf32>
    %27 = arith.truncf %26 : vector<128x4xf32> to vector<128x4xbf16>
    %28 = vector.extract_strided_slice %2 {offsets = [3, 0, 0], sizes = [1, 4, 128], strides = [1, 1, 1]} : vector<9x4x128xbf16> to vector<1x4x128xbf16>
    %29 = vector.shape_cast %28 : vector<1x4x128xbf16> to vector<4x128xbf16>
    %cst_9 = arith.constant dense<0.000000e+00> : vector<128x128xf32>
    %30 = tpu.matmul %27, %29, %cst_9 {dimension_numbers = #tpu.dot_dimension_numbers<[1], [0], [0], [1], [0, 0, 1, 1], [], []>} : vector<128x4xbf16>, vector<4x128xbf16>, vector<128x128xf32> -> vector<128x128xf32>
    %31 = arith.addf %24, %30 : vector<128x128xf32>
    %32 = vector.extract_strided_slice %1 {offsets = [1, 1, 0], sizes = [8, 16, 4], strides = [1, 1, 1]} : vector<10x18x4xf32> to vector<8x16x4xf32>
    %33 = vector.shape_cast %32 : vector<8x16x4xf32> to vector<128x4xf32>
    %34 = arith.truncf %33 : vector<128x4xf32> to vector<128x4xbf16>
    %35 = vector.extract_strided_slice %2 {offsets = [4, 0, 0], sizes = [1, 4, 128], strides = [1, 1, 1]} : vector<9x4x128xbf16> to vector<1x4x128xbf16>
    %36 = vector.shape_cast %35 : vector<1x4x128xbf16> to vector<4x128xbf16>
    %cst_10 = arith.constant dense<0.000000e+00> : vector<128x128xf32>
    %37 = tpu.matmul %34, %36, %cst_10 {dimension_numbers = #tpu.dot_dimension_numbers<[1], [0], [0], [1], [0, 0, 1, 1], [], []>} : vector<128x4xbf16>, vector<4x128xbf16>, vector<128x128xf32> -> vector<128x128xf32>
    %38 = arith.addf %31, %37 : vector<128x128xf32>
    %39 = vector.extract_strided_slice %1 {offsets = [1, 2, 0], sizes = [8, 16, 4], strides = [1, 1, 1]} : vector<10x18x4xf32> to vector<8x16x4xf32>
    %40 = vector.shape_cast %39 : vector<8x16x4xf32> to vector<128x4xf32>
    %41 = arith.truncf %40 : vector<128x4xf32> to vector<128x4xbf16>
    %42 = vector.extract_strided_slice %2 {offsets = [5, 0, 0], sizes = [1, 4, 128], strides = [1, 1, 1]} : vector<9x4x128xbf16> to vector<1x4x128xbf16>
    %43 = vector.shape_cast %42 : vector<1x4x128xbf16> to vector<4x128xbf16>
    %cst_11 = arith.constant dense<0.000000e+00> : vector<128x128xf32>
    %44 = tpu.matmul %41, %43, %cst_11 {dimension_numbers = #tpu.dot_dimension_numbers<[1], [0], [0], [1], [0, 0, 1, 1], [], []>} : vector<128x4xbf16>, vector<4x128xbf16>, vector<128x128xf32> -> vector<128x128xf32>
    %45 = arith.addf %38, %44 : vector<128x128xf32>
    %46 = vector.extract_strided_slice %1 {offsets = [2, 0, 0], sizes = [8, 16, 4], strides = [1, 1, 1]} : vector<10x18x4xf32> to vector<8x16x4xf32>
    %47 = vector.shape_cast %46 : vector<8x16x4xf32> to vector<128x4xf32>
    %48 = arith.truncf %47 : vector<128x4xf32> to vector<128x4xbf16>
    %49 = vector.extract_strided_slice %2 {offsets = [6, 0, 0], sizes = [1, 4, 128], strides = [1, 1, 1]} : vector<9x4x128xbf16> to vector<1x4x128xbf16>
    %50 = vector.shape_cast %49 : vector<1x4x128xbf16> to vector<4x128xbf16>
    %cst_12 = arith.constant dense<0.000000e+00> : vector<128x128xf32>
    %51 = tpu.matmul %48, %50, %cst_12 {dimension_numbers = #tpu.dot_dimension_numbers<[1], [0], [0], [1], [0, 0, 1, 1], [], []>} : vector<128x4xbf16>, vector<4x128xbf16>, vector<128x128xf32> -> vector<128x128xf32>
    %52 = arith.addf %45, %51 : vector<128x128xf32>
    %53 = vector.extract_strided_slice %1 {offsets = [2, 1, 0], sizes = [8, 16, 4], strides = [1, 1, 1]} : vector<10x18x4xf32> to vector<8x16x4xf32>
    %54 = vector.shape_cast %53 : vector<8x16x4xf32> to vector<128x4xf32>
    %55 = arith.truncf %54 : vector<128x4xf32> to vector<128x4xbf16>
    %56 = vector.extract_strided_slice %2 {offsets = [7, 0, 0], sizes = [1, 4, 128], strides = [1, 1, 1]} : vector<9x4x128xbf16> to vector<1x4x128xbf16>
    %57 = vector.shape_cast %56 : vector<1x4x128xbf16> to vector<4x128xbf16>
    %cst_13 = arith.constant dense<0.000000e+00> : vector<128x128xf32>
    %58 = tpu.matmul %55, %57, %cst_13 {dimension_numbers = #tpu.dot_dimension_numbers<[1], [0], [0], [1], [0, 0, 1, 1], [], []>} : vector<128x4xbf16>, vector<4x128xbf16>, vector<128x128xf32> -> vector<128x128xf32>
    %59 = arith.addf %52, %58 : vector<128x128xf32>
    %60 = vector.extract_strided_slice %1 {offsets = [2, 2, 0], sizes = [8, 16, 4], strides = [1, 1, 1]} : vector<10x18x4xf32> to vector<8x16x4xf32>
    %61 = vector.shape_cast %60 : vector<8x16x4xf32> to vector<128x4xf32>
    %62 = arith.truncf %61 : vector<128x4xf32> to vector<128x4xbf16>
    %63 = vector.extract_strided_slice %2 {offsets = [8, 0, 0], sizes = [1, 4, 128], strides = [1, 1, 1]} : vector<9x4x128xbf16> to vector<1x4x128xbf16>
    %64 = vector.shape_cast %63 : vector<1x4x128xbf16> to vector<4x128xbf16>
    %cst_14 = arith.constant dense<0.000000e+00> : vector<128x128xf32>
    %65 = tpu.matmul %62, %64, %cst_14 {dimension_numbers = #tpu.dot_dimension_numbers<[1], [0], [0], [1], [0, 0, 1, 1], [], []>} : vector<128x4xbf16>, vector<4x128xbf16>, vector<128x128xf32> -> vector<128x128xf32>
    %66 = arith.addf %59, %65 : vector<128x128xf32>
    %c0_15 = arith.constant 0 : index
    %c0_16 = arith.constant 0 : index
    %67 = vector.load %arg3[%c0_15, %c0_16] : memref<128x128xf32, #tpu.memory_space<vmem>>, vector<128x128xf32>
    tpu.vector_store %arg3[%c0_15, %c0_16], %66 {strides = array<i32>} : memref<128x128xf32, #tpu.memory_space<vmem>>, vector<128x128xf32>,
    %cst_17 = arith.constant dense<0.000000e+00> : vector<128xf32>
    %68 = vector.multi_reduction <add>, %66, %cst_17 [0] : vector<128x128xf32> to vector<128xf32>
    %69 = vector.shape_cast %68 : vector<128xf32> to vector<1x128xf32>
    %70 = arith.mulf %66, %66 : vector<128x128xf32>
    %cst_18 = arith.constant dense<0.000000e+00> : vector<128xf32>
    %71 = vector.multi_reduction <add>, %70, %cst_18 [0] : vector<128x128xf32> to vector<128xf32>
    %72 = vector.shape_cast %71 : vector<128xf32> to vector<1x128xf32>
    %73 = tpu.concatenate %69, %72 in 0 : vector<1x128xf32>, vector<1x128xf32> -> vector<2x128xf32>
    %74 = vector.shape_cast %73 : vector<2x128xf32> to vector<1x2x128xf32>
    %c0_19 = arith.constant 0 : index
    %c0_20 = arith.constant 0 : index
    %c0_21 = arith.constant 0 : index
    %75 = vector.load %arg4[%c0_19, %c0_20, %c0_21] : memref<1x2x128xf32, #tpu.memory_space<vmem>>, vector<1x2x128xf32>
    tpu.vector_store %arg4[%c0_19, %c0_20, %c0_21], %74 {strides = array<i32>} : memref<1x2x128xf32, #tpu.memory_space<vmem>>, vector<1x2x128xf32>,
    return
  }
  func.func @transform_0(%arg0: i32) -> (i32, i32, i32, i32) {
    %c0_i32 = arith.constant 0 : i32
    %c0_i32_0 = arith.constant 0 : i32
    %c0_i32_1 = arith.constant 0 : i32
    %c0_i32_2 = arith.constant 0 : i32
    return %arg0, %c0_i32, %c0_i32_0, %c0_i32_1 : i32, i32, i32, i32
  }
  func.func @transform_1(%arg0: i32) -> (i32, i32, i32) {
    %c0_i32 = arith.constant 0 : i32
    %c0_i32_0 = arith.constant 0 : i32
    %c0_i32_1 = arith.constant 0 : i32
    %c0_i32_2 = arith.constant 0 : i32
    return %c0_i32, %c0_i32_0, %c0_i32_1 : i32, i32, i32
  }
  func.func @transform_2(%arg0: i32) -> (i32, i32) {
    %c0_i32 = arith.constant 0 : i32
    %c0_i32_0 = arith.constant 0 : i32
    return %arg0, %c0_i32 : i32, i32
  }
  func.func @transform_3(%arg0: i32) -> (i32, i32, i32) {
    %c0_i32 = arith.constant 0 : i32
    %c0_i32_0 = arith.constant 0 : i32
    %c0_i32_1 = arith.constant 0 : i32
    return %arg0, %c0_i32, %c0_i32_0 : i32, i32, i32
  }
}

</mosaic_0001>

<llo_original>
// kernel: tpu_custom_call.1
$region0: #{tpu_custom_call.1}
  #allocation0 [shape = 'u32[]', space=smem, size = 0x4, offset = 0x4, fixed_abs, tag = 'smem constant byte address 0x4 - core index']
  #allocation1 [shape = 'u32[144,128]{1,0:T(1,128)}', space=vmem, size = 0x12000, scoped, tag = 'internal scratch']
  %s0 = inlined_call_operand.vmem [shape: f32[4,10,18,4], index: 0, kind: input, shape index: {}]
  %s1 = inlined_call_operand.vmem [shape: bf16[9,4,128], index: 1, kind: input, shape index: {}]
  %s2 = inlined_call_operand.hbm [shape: f32[512,128], index: 2, kind: output, shape index: {0}]
  %s3 = inlined_call_operand.hbm [shape: f32[4,2,128], index: 3, kind: output, shape index: {1}]
  %4 = xla_tuple %s2, %s3
  %s5 = sld [smem:[#allocation0]]
  $region49: #{tpu_custom_call.1} parent=0
    _
  %s7 = ssub.s32 1, %s5
  %s8 = scalar_select 0, %s7, %s5
  $region1: #{tpu_custom_call.1} parent=0
    #allocation2 [shape = 'u8[131072]{0}', space=vmem, size = 0x20000, scoped, tag = 'output window, operand 0']
    #allocation3 [shape = 's32[2]{0}', space=sflag, size = 0x8, scoped, tag = 'scoped memory for tpu_custom_call.1']
    #allocation4 [shape = 'u8[2048]{0}', space=vmem, size = 0x800, scoped, tag = 'output window, operand 1']
    #allocation5 [shape = 's32[2]{0}', space=sflag, size = 0x8, scoped, tag = 'scoped memory for tpu_custom_call.1']
    %9 = vsyncpa [#allocation3], 0
    %s10 = scalar_lea.sflag [#allocation3], 1
    %11 = vsyncpa %s10, 0
    %12 = vsyncpa [#allocation5], 0
    %s13 = scalar_lea.sflag [#allocation5], 1
    %14 = vsyncpa %s13, 0
    loop: start=0, step=1, limit=6
    $region2: #{tpu_custom_call.1} parent=1 // loop_pre_header
      _
    $region3: #{tpu_custom_call.1} parent=1 // loop_header
      %s16 = sphi 0, %s20
      %p17 = scmp.ge.s32.totalorder %s16, 6
      %s26 = sphi 0, %s28
      %s29 = sphi 0, %s26
      %s30 = sphi 0, %s29
      %s46 = sphi 0, %s30
      %s50 = sphi 0, %s50
      %s52 = sphi 0, %s50
      %s53 = sphi 0, %s52
      %s67 = sphi 0, %s53
      %s73 = sphi 0, %s75
      %s76 = sphi 0, %s73
      %s77 = sphi 0, %s76
      %s93 = sphi 0, %s77
      %s99 = sphi 0, %s101
      %s102 = sphi 0, %s99
      %s103 = sphi 0, %s102
      %s119 = sphi 0, %s103
    $region4: #{tpu_custom_call.1} parent=1 // loop_header_branch
      %19 = sbr.rel (%p17) target = $region8
    $region5: #{tpu_custom_call.1} parent=1 // loop_body
      %s21 = ssub.s32 %s16, 1
      %s22 = ssub.s32 %s16, 2
      %s23 = sadd.s32 %s16, 1
      %s24 = ssub.s32 %s16, %s23
      %p25 = scmp.eq.s32.totalorder %s24, 0
      %s27 = sadd.s32 %s26, 1
      %s28 = scalar_select %p25, %s26, %s27
      %p31 = pneg %p25
      %p32 = scmp.eq.s32.totalorder %s16, 3
      %p33 = por %p31, %p32
      %p34 = scmp.ne.s32.totalorder %s26, %s29
      %p35 = scmp.eq.s32.totalorder %s16, 0
      %p36 = por %p34, %p35
      %p37 = scmp.ne.s32.totalorder %s26, %s29
      %p38 = scmp.eq.s32.totalorder %s21, 3
      %p39 = por %p37, %p38
      %p40 = scmp.ne.s32.totalorder %s29, %s30
      %p41 = scmp.eq.s32.totalorder %s21, 0
      %p42 = por %p40, %p41
      %p43 = scmp.ne.s32.totalorder %s29, %s30
      %p44 = scmp.eq.s32.totalorder %s22, 3
      %p45 = por %p43, %p44
      %p47 = scmp.ne.s32.totalorder %s30, %s46
      %p48 = scmp.eq.s32.totalorder %s22, 0
      %p49 = por %p47, %p48
      %s51 = sadd.s32 %s50, 1
      %p54 = scmp.eq.s32.totalorder %s16, 3
      %p55 = scmp.ne.s32.totalorder %s50, %s52
      %p56 = scmp.eq.s32.totalorder %s16, 0
      %p57 = por %p55, %p56
      %p58 = scmp.ne.s32.totalorder %s50, %s52
      %p59 = scmp.eq.s32.totalorder %s21, 3
      %p60 = por %p58, %p59
      %p61 = scmp.ne.s32.totalorder %s52, %s53
      %p62 = scmp.eq.s32.totalorder %s21, 0
      %p63 = por %p61, %p62
      %p64 = scmp.ne.s32.totalorder %s52, %s53
      %p65 = scmp.eq.s32.totalorder %s22, 3
      %p66 = por %p64, %p65
      %p68 = scmp.ne.s32.totalorder %s53, %s67
      %p69 = scmp.eq.s32.totalorder %s22, 0
      %p70 = por %p68, %p69
      %s71 = ssub.s32 %s16, %s23
      %p72 = scmp.eq.s32.totalorder %s71, 0
      %s74 = sadd.s32 %s73, 1
      %s75 = scalar_select %p72, %s73, %s74
      %p78 = pneg %p72
      %p79 = scmp.eq.s32.totalorder %s16, 3
      %p80 = por %p78, %p79
      %p81 = scmp.ne.s32.totalorder %s73, %s76
      %p82 = scmp.eq.s32.totalorder %s16, 0
      %p83 = por %p81, %p82
      %p84 = scmp.ne.s32.totalorder %s73, %s76
      %p85 = scmp.eq.s32.totalorder %s21, 3
      %p86 = por %p84, %p85
      %p87 = scmp.ne.s32.totalorder %s76, %s77
      %p88 = scmp.eq.s32.totalorder %s21, 0
      %p89 = por %p87, %p88
      %p90 = scmp.ne.s32.totalorder %s76, %s77
      %p91 = scmp.eq.s32.totalorder %s22, 3
      %p92 = por %p90, %p91
      %p94 = scmp.ne.s32.totalorder %s77, %s93
      %p95 = scmp.eq.s32.totalorder %s22, 0
      %p96 = por %p94, %p95
      %s97 = ssub.s32 %s16, %s23
      %p98 = scmp.eq.s32.totalorder %s97, 0
      %s100 = sadd.s32 %s99, 1
      %s101 = scalar_select %p98, %s99, %s100
      %p104 = pneg %p98
      %p105 = scmp.eq.s32.totalorder %s16, 3
      %p106 = por %p104, %p105
      %p107 = scmp.ne.s32.totalorder %s99, %s102
      %p108 = scmp.eq.s32.totalorder %s16, 0
      %p109 = por %p107, %p108
      %p110 = scmp.ne.s32.totalorder %s99, %s102
      %p111 = scmp.eq.s32.totalorder %s21, 3
      %p112 = por %p110, %p111
      %p113 = scmp.ne.s32.totalorder %s102, %s103
      %p114 = scmp.eq.s32.totalorder %s21, 0
      %p115 = por %p113, %p114
      %p116 = scmp.ne.s32.totalorder %s102, %s103
      %p117 = scmp.eq.s32.totalorder %s22, 3
      %p118 = por %p116, %p117
      %p120 = scmp.ne.s32.totalorder %s103, %s119
      %p121 = scmp.eq.s32.totalorder %s22, 0
      %p122 = por %p120, %p121
      %p123 = scmp.le.s32.totalorder 1, %s16
      %p124 = scmp.lt.s32.totalorder %s16, 5
      %p125 = pnand %p123, %p124
      %p126 = pneg %p125
      // Predicated region
      $region9: #{tpu_custom_call.1} parent=5 // pred_check
        _
      $region10: #{tpu_custom_call.1} parent=5 // pred_check_branch
        %128 = sbr.rel (%p125) target = $region12
      $region11: #{tpu_custom_call.1} parent=5 // pred_region
        %s129 = ssub.s32 %s16, 1
        // Predicated region
        $region13: #{tpu_custom_call.1} parent=11 // pred_check
          %p130 = pneg %p63
        $region14: #{tpu_custom_call.1} parent=11 // pred_check_branch
          %132 = sbr.rel (%p130) target = $region16
        $region15: #{tpu_custom_call.1} parent=11 // pred_region
          _
        $region16: #{tpu_custom_call.1} parent=11 // pred_fallthru
          _
      $region12: #{tpu_custom_call.1} parent=5 // pred_fallthru
        _
      %p133 = scmp.lt.s32.totalorder %s16, 4
      // Predicated region
      $region17: #{tpu_custom_call.1} parent=5 // pred_check
        %p134 = pneg %p133
      $region18: #{tpu_custom_call.1} parent=5 // pred_check_branch
        %136 = sbr.rel (%p134) target = $region20
      $region19: #{tpu_custom_call.1} parent=5 // pred_region
        // Predicated region
        $region21: #{tpu_custom_call.1} parent=19 // pred_check
          %p137 = pneg %p36
        $region22: #{tpu_custom_call.1} parent=19 // pred_check_branch
          %139 = sbr.rel (%p137) target = $region24
        $region23: #{tpu_custom_call.1} parent=19 // pred_region
          %p140 = scmp.lt.s32.totalorder %s16, 3
          %s141 = scalar_select %p140, %s16, 3
          %s142 = smul.addr %s141, 30
          %s143 = smul.addr %s142, 8
          %s144 = scalar_lea.vmem %s0, %s143
        $region24: #{tpu_custom_call.1} parent=19 // pred_fallthru
          _
      $region20: #{tpu_custom_call.1} parent=5 // pred_fallthru
        _
      %p145 = scmp.le.s32.totalorder 1, %s16
      %p146 = scmp.lt.s32.totalorder %s16, 5
      %p147 = pnand %p145, %p146
      %p148 = pneg %p147
      // Predicated region
      $region25: #{tpu_custom_call.1} parent=5 // pred_check
        _
      $region26: #{tpu_custom_call.1} parent=5 // pred_check_branch
        %150 = sbr.rel (%p147) target = $region28
      $region27: #{tpu_custom_call.1} parent=5 // pred_region
        %s151 = ssub.s32 %s16, 1
        %p152 = scmp.lt.s32.totalorder %s21, 3
        %s153 = scalar_select %p152, %s21, 3
        %s154 = smul.addr %s153, 30
        %s155 = smul.addr %s154, 8
        %s156 = scalar_lea.vmem %s0, %s155
        %p157 = pneg %p42
        %p158 = pneg %p39
        %p159 = pneg %p63
        %p160 = pneg %p60
        %p161 = pneg %p89
        %p162 = pneg %p86
        %s163 = sand.u32 %s76, 1
        %s164 = scalar_lea.sflag [#allocation3], %s163
        %s165 = sand.u32 %s76, 1
        %s166 = smul.addr %s165, 128
        %s167 = scalar_lea.vmem [#allocation2], %s166
        %p168 = pneg %p115
        %p169 = pneg %p112
        %s170 = sand.u32 %s102, 1
        %s171 = scalar_lea.sflag [#allocation5], %s170
        %s172 = sand.u32 %s102, 1
        %s173 = smul.addr %s172, 2
        %s174 = scalar_lea.vmem [#allocation4], %s173
        %p175 = scmp.lt.s32.totalorder %s21, 3
        %s176 = scalar_select %p175, %s21, 3
        %s177 = smul.addr %s176, 30
        %s178 = smul.addr %s177, 8
        %s179 = scalar_lea.vmem %s0, %s178
        %s180 = smul.u32 16, %s21
        %v182 = vld [vmem:[%s179] sm:$0xff]
        %v183 = vld [vmem:[%s179 + $0x8] sm:$0xff]
        %v184 = vld [vmem:[%s179 + $0x10] sm:$0x3]
        %v185 = vld [vmem:[%s179 + $0x18] sm:$0xff]
        %v186 = vld [vmem:[%s179 + $0x20] sm:$0xff]
        %v187 = vld [vmem:[%s179 + $0x28] sm:$0x3]
        %v188 = vld [vmem:[%s179 + $0x30] sm:$0xff]
        %v189 = vld [vmem:[%s179 + $0x38] sm:$0xff]
        %v190 = vld [vmem:[%s179 + $0x40] sm:$0x3]
        %v191 = vld [vmem:[%s179 + $0x48] sm:$0xff]
        %v192 = vld [vmem:[%s179 + $0x50] sm:$0xff]
        %v193 = vld [vmem:[%s179 + $0x58] sm:$0x3]
        %v194 = vld [vmem:[%s179 + $0x60] sm:$0xff]
        %v195 = vld [vmem:[%s179 + $0x68] sm:$0xff]
        %v196 = vld [vmem:[%s179 + $0x70] sm:$0x3]
        %v197 = vld [vmem:[%s179 + $0x78] sm:$0xff]
        %v198 = vld [vmem:[%s179 + $0x80] sm:$0xff]
        %v199 = vld [vmem:[%s179 + $0x88] sm:$0x3]
        %v200 = vld [vmem:[%s179 + $0x90] sm:$0xff]
        %v201 = vld [vmem:[%s179 + $0x98] sm:$0xff]
        %v202 = vld [vmem:[%s179 + $0xa0] sm:$0x3]
        %v203 = vld [vmem:[%s179 + $0xa8] sm:$0xff]
        %v204 = vld [vmem:[%s179 + $0xb0] sm:$0xff]
        %v205 = vld [vmem:[%s179 + $0xb8] sm:$0x3]
        %v206 = vld [vmem:[%s179 + $0xc0] sm:$0xff]
        %v207 = vld [vmem:[%s179 + $0xc8] sm:$0xff]
        %v208 = vld [vmem:[%s179 + $0xd0] sm:$0x3]
        %v209 = vld [vmem:[%s179 + $0xd8] sm:$0xff]
        %v210 = vld [vmem:[%s179 + $0xe0] sm:$0xff]
        %v211 = vld [vmem:[%s179 + $0xe8] sm:$0x3]
        %v212 = vld [vmem:[%s1] sm:$0x3]
        %v213 = vld [vmem:[%s1 + $0x2] sm:$0x3]
        %v214 = vld [vmem:[%s1 + $0x4] sm:$0x3]
        %v215 = vld [vmem:[%s1 + $0x6] sm:$0x3]
        %v216 = vld [vmem:[%s1 + $0x8] sm:$0x3]
        %v217 = vld [vmem:[%s1 + $0xa] sm:$0x3]
        %v218 = vld [vmem:[%s1 + $0xc] sm:$0x3]
        %v219 = vld [vmem:[%s1 + $0xe] sm:$0x3]
        %v220 = vld [vmem:[%s1 + $0x10] sm:$0x3]
        %v221 = vpack.c.bf16 %v183, %v182
        %v222 = vpack.c.bf16 %v186, %v185
        %v223 = vpack.c.bf16 %v189, %v188
        %v224 = vpack.c.bf16 %v192, %v191
        %v225 = vpack.c.bf16 %v195, %v194
        %v226 = vpack.c.bf16 %v198, %v197
        %v227 = vpack.c.bf16 %v201, %v200
        %v228 = vpack.c.bf16 %v204, %v203
        %vm253 = vcmask 1046528
        %v254 = vrot.slane %v182, 1
        %v255 = vrot.slane %v183, 1
        %v256 = vsel %vm253, %v254, %v255
        %v257 = vrot.slane %v184, 1
        %v258 = vsel %vm253, %v255, %v257
        %v259 = vrot.slane %v185, 1
        %v260 = vrot.slane %v186, 1
        %v261 = vsel %vm253, %v259, %v260
        %v262 = vrot.slane %v187, 1
        %v263 = vsel %vm253, %v260, %v262
        %v264 = vrot.slane %v188, 1
        %v265 = vrot.slane %v189, 1
        %v266 = vsel %vm253, %v264, %v265
        %v267 = vrot.slane %v190, 1
        %v268 = vsel %vm253, %v265, %v267
        %v269 = vrot.slane %v191, 1
        %v270 = vrot.slane %v192, 1
        %v271 = vsel %vm253, %v269, %v270
        %v272 = vrot.slane %v193, 1
        %v273 = vsel %vm253, %v270, %v272
        %v274 = vrot.slane %v194, 1
        %v275 = vrot.slane %v195, 1
        %v276 = vsel %vm253, %v274, %v275
        %v277 = vrot.slane %v196, 1
        %v278 = vsel %vm253, %v275, %v277
        %v279 = vrot.slane %v197, 1
        %v280 = vrot.slane %v198, 1
        %v281 = vsel %vm253, %v279, %v280
        %v282 = vrot.slane %v199, 1
        %v283 = vsel %vm253, %v280, %v282
        %v284 = vrot.slane %v200, 1
        %v285 = vrot.slane %v201, 1
        %v286 = vsel %vm253, %v284, %v285
        %v287 = vrot.slane %v202, 1
        %v288 = vsel %vm253, %v285, %v287
        %v289 = vrot.slane %v203, 1
        %v290 = vrot.slane %v204, 1
        %v291 = vsel %vm253, %v289, %v290
        %v292 = vrot.slane %v205, 1
        %v293 = vsel %vm253, %v290, %v292
        %v310 = vpack.c.bf16 %v258, %v256
        %v311 = vpack.c.bf16 %v263, %v261
        %v312 = vpack.c.bf16 %v268, %v266
        %v313 = vpack.c.bf16 %v273, %v271
        %v314 = vpack.c.bf16 %v278, %v276
        %v315 = vpack.c.bf16 %v283, %v281
        %v316 = vpack.c.bf16 %v288, %v286
        %v317 = vpack.c.bf16 %v293, %v291
        %vm318 = vcmask 31744
        %v320 = vsel %vm318, %v310, 0
        %v323 = vsel %vm318, %v311, 0
        %v326 = vsel %vm318, %v312, 0
        %v329 = vsel %vm318, %v313, 0
        %v332 = vsel %vm318, %v314, 0
        %v335 = vsel %vm318, %v315, 0
        %v338 = vsel %vm318, %v316, 0
        %v341 = vsel %vm318, %v317, 0
        %vm343 = vcmask 1041408
        %v345 = vsel %vm343, %v213, 0
        %347 = vmatprep.subr.bf16.mxu0 0
        %348 = vmatpush1.bf16.msra.mxu0 0
        %349 = vmatprep.subr.bf16.mxu0 0
        %350 = vmatpush1.bf16.msra.mxu0 0
        %351 = vmatprep.subr.bf16.mxu0 0
        %352 = vmatpush1.bf16.msra.mxu0 0
        %353 = vmatprep.subr.bf16.mxu0 0
        %354 = vmatpush1.bf16.msra.mxu0 0
        %355 = vmatprep.subr.bf16.mxu0 0
        %356 = vmatpush1.bf16.msra.mxu0 0
        %357 = vmatprep.subr.bf16.mxu0 0
        %358 = vmatpush1.bf16.msra.mxu0 0
        %359 = vmatprep.subr.bf16.mxu0 0
        %360 = vmatpush1.bf16.msra.mxu0 0
        %361 = vmatprep.subr.bf16.mxu0 0
        %362 = vmatpush1.bf16.msra.mxu0 %v345
        %363 = vmatprep.subr.bf16.mxu0 0
        %364 = vmatpush2.bf16.msra.mxu0 0
        %365 = vmatprep.subr.bf16.mxu0 0
        %366 = vmatpush2.bf16.msra.mxu0 0
        %367 = vmatprep.subr.bf16.mxu0 0
        %368 = vmatpush2.bf16.msra.mxu0 0
        %369 = vmatprep.subr.bf16.mxu0 0
        %370 = vmatpush2.bf16.msra.mxu0 0
        %371 = vmatprep.subr.bf16.mxu0 0
        %372 = vmatpush2.bf16.msra.mxu0 0
        %373 = vmatprep.subr.bf16.mxu0 0
        %374 = vmatpush2.bf16.msra.mxu0 0
        %375 = vmatprep.subr.bf16.mxu0 0
        %376 = vmatpush2.bf16.msra.mxu0 0
        %377 = vmatprep.subr.bf16.mxu0 0
        %378 = vmatpush2.bf16.msra.mxu0 0
        %379 = vmatprep.mubr.bf16.mxu0 0
        %380 = vmatmul.mubr.bf16.gmra.mxu0 %v320
        %v381 = vpop.f32.mrf.mxu0
        %v382 = vadd.f32 0.0, %v381
        %v383 = vpop.f32.mrf.mxu0
        %v384 = vpop.f32.mrf.mxu0
        %v385 = vadd.f32 0.0, %v384
        %v386 = vpop.f32.mrf.mxu0
        %387 = vmatprep.mubr.bf16.mxu0 0
        %388 = vmatmul.mubr.bf16.gmra.mxu0 %v323
        %v389 = vpop.f32.mrf.mxu0
        %v390 = vadd.f32 0.0, %v389
        %v391 = vpop.f32.mrf.mxu0
        %v392 = vpop.f32.mrf.mxu0
        %v393 = vadd.f32 0.0, %v392
        %v394 = vpop.f32.mrf.mxu0
        %395 = vmatprep.mubr.bf16.mxu0 0
        %396 = vmatmul.mubr.bf16.gmra.mxu0 %v326
        %v397 = vpop.f32.mrf.mxu0
        %v398 = vadd.f32 0.0, %v397
        %v399 = vpop.f32.mrf.mxu0
        %v400 = vpop.f32.mrf.mxu0
        %v401 = vadd.f32 0.0, %v400
        %v402 = vpop.f32.mrf.mxu0
        %403 = vmatprep.mubr.bf16.mxu0 0
        %404 = vmatmul.mubr.bf16.gmra.mxu0 %v329
        %v405 = vpop.f32.mrf.mxu0
        %v406 = vadd.f32 0.0, %v405
        %v407 = vpop.f32.mrf.mxu0
        %v408 = vpop.f32.mrf.mxu0
        %v409 = vadd.f32 0.0, %v408
        %v410 = vpop.f32.mrf.mxu0
        %411 = vmatprep.mubr.bf16.mxu0 0
        %412 = vmatmul.mubr.bf16.gmra.mxu0 %v332
        %v413 = vpop.f32.mrf.mxu0
        %v414 = vadd.f32 0.0, %v413
        %v415 = vpop.f32.mrf.mxu0
        %v416 = vpop.f32.mrf.mxu0
        %v417 = vadd.f32 0.0, %v416
        %v418 = vpop.f32.mrf.mxu0
        %419 = vmatprep.mubr.bf16.mxu0 0
        %420 = vmatmul.mubr.bf16.gmra.mxu0 %v335
        %v421 = vpop.f32.mrf.mxu0
        %v422 = vadd.f32 0.0, %v421
        %v423 = vpop.f32.mrf.mxu0
        %v424 = vpop.f32.mrf.mxu0
        %v425 = vadd.f32 0.0, %v424
        %v426 = vpop.f32.mrf.mxu0
        %427 = vmatprep.mubr.bf16.mxu0 0
        %428 = vmatmul.mubr.bf16.gmra.mxu0 %v338
        %v429 = vpop.f32.mrf.mxu0
        %v430 = vadd.f32 0.0, %v429
        %v431 = vpop.f32.mrf.mxu0
        %v432 = vpop.f32.mrf.mxu0
        %v433 = vadd.f32 0.0, %v432
        %v434 = vpop.f32.mrf.mxu0
        %435 = vmatprep.mubr.bf16.mxu0 0
        %436 = vmatmul.mubr.bf16.gmra.mxu0 %v341
        %v437 = vpop.f32.mrf.mxu0
        %v438 = vadd.f32 0.0, %v437
        %v439 = vpop.f32.mrf.mxu0
        %v440 = vpop.f32.mrf.mxu0
        %v441 = vadd.f32 0.0, %v440
        %v442 = vpop.f32.mrf.mxu0
        %443 = vdwg.mxu0
        %v445 = vsel %vm318, %v221, 0
        %v448 = vsel %vm318, %v222, 0
        %v451 = vsel %vm318, %v223, 0
        %v454 = vsel %vm318, %v224, 0
        %v457 = vsel %vm318, %v225, 0
        %v460 = vsel %vm318, %v226, 0
        %v463 = vsel %vm318, %v227, 0
        %v466 = vsel %vm318, %v228, 0
        %v469 = vsel %vm343, %v212, 0
        %471 = vmatprep.subr.bf16.mxu0 0
        %472 = vmatpush1.bf16.msra.mxu0 0
        %473 = vmatprep.subr.bf16.mxu0 0
        %474 = vmatpush1.bf16.msra.mxu0 0
        %475 = vmatprep.subr.bf16.mxu0 0
        %476 = vmatpush1.bf16.msra.mxu0 0
        %477 = vmatprep.subr.bf16.mxu0 0
        %478 = vmatpush1.bf16.msra.mxu0 0
        %479 = vmatprep.subr.bf16.mxu0 0
        %480 = vmatpush1.bf16.msra.mxu0 0
        %481 = vmatprep.subr.bf16.mxu0 0
        %482 = vmatpush1.bf16.msra.mxu0 0
        %483 = vmatprep.subr.bf16.mxu0 0
        %484 = vmatpush1.bf16.msra.mxu0 0
        %485 = vmatprep.subr.bf16.mxu0 0
        %486 = vmatpush1.bf16.msra.mxu0 %v469
        %487 = vmatprep.subr.bf16.mxu0 0
        %488 = vmatpush2.bf16.msra.mxu0 0
        %489 = vmatprep.subr.bf16.mxu0 0
        %490 = vmatpush2.bf16.msra.mxu0 0
        %491 = vmatprep.subr.bf16.mxu0 0
        %492 = vmatpush2.bf16.msra.mxu0 0
        %493 = vmatprep.subr.bf16.mxu0 0
        %494 = vmatpush2.bf16.msra.mxu0 0
        %495 = vmatprep.subr.bf16.mxu0 0
        %496 = vmatpush2.bf16.msra.mxu0 0
        %497 = vmatprep.subr.bf16.mxu0 0
        %498 = vmatpush2.bf16.msra.mxu0 0
        %499 = vmatprep.subr.bf16.mxu0 0
        %500 = vmatpush2.bf16.msra.mxu0 0
        %501 = vmatprep.subr.bf16.mxu0 0
        %502 = vmatpush2.bf16.msra.mxu0 0
        %503 = vmatprep.mubr.bf16.mxu0 0
        %504 = vmatmul.mubr.bf16.gmra.mxu0 %v445
        %v505 = vpop.f32.mrf.mxu0
        %v506 = vadd.f32 %v382, %v505
        %v507 = vpop.f32.mrf.mxu0
        %v508 = vpop.f32.mrf.mxu0
        %v509 = vadd.f32 %v385, %v508
        %v510 = vpop.f32.mrf.mxu0
        %511 = vmatprep.mubr.bf16.mxu0 0
        %512 = vmatmul.mubr.bf16.gmra.mxu0 %v448
        %v513 = vpop.f32.mrf.mxu0
        %v514 = vadd.f32 %v390, %v513
        %v515 = vpop.f32.mrf.mxu0
        %v516 = vpop.f32.mrf.mxu0
        %v517 = vadd.f32 %v393, %v516
        %v518 = vpop.f32.mrf.mxu0
        %519 = vmatprep.mubr.bf16.mxu0 0
        %520 = vmatmul.mubr.bf16.gmra.mxu0 %v451
        %v521 = vpop.f32.mrf.mxu0
        %v522 = vadd.f32 %v398, %v521
        %v523 = vpop.f32.mrf.mxu0
        %v524 = vpop.f32.mrf.mxu0
        %v525 = vadd.f32 %v401, %v524
        %v526 = vpop.f32.mrf.mxu0
        %527 = vmatprep.mubr.bf16.mxu0 0
        %528 = vmatmul.mubr.bf16.gmra.mxu0 %v454
        %v529 = vpop.f32.mrf.mxu0
        %v530 = vadd.f32 %v406, %v529
        %v531 = vpop.f32.mrf.mxu0
        %v532 = vpop.f32.mrf.mxu0
        %v533 = vadd.f32 %v409, %v532
        %v534 = vpop.f32.mrf.mxu0
        %535 = vmatprep.mubr.bf16.mxu0 0
        %536 = vmatmul.mubr.bf16.gmra.mxu0 %v457
        %v537 = vpop.f32.mrf.mxu0
        %v538 = vadd.f32 %v414, %v537
        %v539 = vpop.f32.mrf.mxu0
        %v540 = vpop.f32.mrf.mxu0
        %v541 = vadd.f32 %v417, %v540
        %v542 = vpop.f32.mrf.mxu0
        %543 = vmatprep.mubr.bf16.mxu0 0
        %544 = vmatmul.mubr.bf16.gmra.mxu0 %v460
        %v545 = vpop.f32.mrf.mxu0
        %v546 = vadd.f32 %v422, %v545
        %v547 = vpop.f32.mrf.mxu0
        %v548 = vpop.f32.mrf.mxu0
        %v549 = vadd.f32 %v425, %v548
        %v550 = vpop.f32.mrf.mxu0
        %551 = vmatprep.mubr.bf16.mxu0 0
        %552 = vmatmul.mubr.bf16.gmra.mxu0 %v463
        %v553 = vpop.f32.mrf.mxu0
        %v554 = vadd.f32 %v430, %v553
        %v555 = vpop.f32.mrf.mxu0
        %v556 = vpop.f32.mrf.mxu0
        %v557 = vadd.f32 %v433, %v556
        %v558 = vpop.f32.mrf.mxu0
        %559 = vmatprep.mubr.bf16.mxu0 0
        %560 = vmatmul.mubr.bf16.gmra.mxu0 %v466
        %v561 = vpop.f32.mrf.mxu0
        %v562 = vadd.f32 %v438, %v561
        %v563 = vpop.f32.mrf.mxu0
        %v564 = vpop.f32.mrf.mxu0
        %v565 = vadd.f32 %v441, %v564
        %v566 = vpop.f32.mrf.mxu0
        %567 = vdwg.mxu0
        %vm568 = vcmask 1045504
        %v569 = vrot.slane %v182, 2
        %v570 = vrot.slane %v183, 2
        %v571 = vsel %vm568, %v569, %v570
        %v572 = vrot.slane %v184, 2
        %v573 = vsel %vm568, %v570, %v572
        %v574 = vrot.slane %v185, 2
        %v575 = vrot.slane %v186, 2
        %v576 = vsel %vm568, %v574, %v575
        %v577 = vrot.slane %v187, 2
        %v578 = vsel %vm568, %v575, %v577
        %v579 = vrot.slane %v188, 2
        %v580 = vrot.slane %v189, 2
        %v581 = vsel %vm568, %v579, %v580
        %v582 = vrot.slane %v190, 2
        %v583 = vsel %vm568, %v580, %v582
        %v584 = vrot.slane %v191, 2
        %v585 = vrot.slane %v192, 2
        %v586 = vsel %vm568, %v584, %v585
        %v587 = vrot.slane %v193, 2
        %v588 = vsel %vm568, %v585, %v587
        %v589 = vrot.slane %v194, 2
        %v590 = vrot.slane %v195, 2
        %v591 = vsel %vm568, %v589, %v590
        %v592 = vrot.slane %v196, 2
        %v593 = vsel %vm568, %v590, %v592
        %v594 = vrot.slane %v197, 2
        %v595 = vrot.slane %v198, 2
        %v596 = vsel %vm568, %v594, %v595
        %v597 = vrot.slane %v199, 2
        %v598 = vsel %vm568, %v595, %v597
        %v599 = vrot.slane %v200, 2
        %v600 = vrot.slane %v201, 2
        %v601 = vsel %vm568, %v599, %v600
        %v602 = vrot.slane %v202, 2
        %v603 = vsel %vm568, %v600, %v602
        %v604 = vrot.slane %v203, 2
        %v605 = vrot.slane %v204, 2
        %v606 = vsel %vm568, %v604, %v605
        %v607 = vrot.slane %v205, 2
        %v608 = vsel %vm568, %v605, %v607
        %v625 = vpack.c.bf16 %v573, %v571
        %v626 = vpack.c.bf16 %v578, %v576
        %v627 = vpack.c.bf16 %v583, %v581
        %v628 = vpack.c.bf16 %v588, %v586
        %v629 = vpack.c.bf16 %v593, %v591
        %v630 = vpack.c.bf16 %v598, %v596
        %v631 = vpack.c.bf16 %v603, %v601
        %v632 = vpack.c.bf16 %v608, %v606
        %v634 = vsel %vm318, %v625, 0
        %v637 = vsel %vm318, %v626, 0
        %v640 = vsel %vm318, %v627, 0
        %v643 = vsel %vm318, %v628, 0
        %v646 = vsel %vm318, %v629, 0
        %v649 = vsel %vm318, %v630, 0
        %v652 = vsel %vm318, %v631, 0
        %v655 = vsel %vm318, %v632, 0
        %v658 = vsel %vm343, %v214, 0
        %660 = vmatprep.subr.bf16.mxu0 0
        %661 = vmatpush1.bf16.msra.mxu0 0
        %662 = vmatprep.subr.bf16.mxu0 0
        %663 = vmatpush1.bf16.msra.mxu0 0
        %664 = vmatprep.subr.bf16.mxu0 0
        %665 = vmatpush1.bf16.msra.mxu0 0
        %666 = vmatprep.subr.bf16.mxu0 0
        %667 = vmatpush1.bf16.msra.mxu0 0
        %668 = vmatprep.subr.bf16.mxu0 0
        %669 = vmatpush1.bf16.msra.mxu0 0
        %670 = vmatprep.subr.bf16.mxu0 0
        %671 = vmatpush1.bf16.msra.mxu0 0
        %672 = vmatprep.subr.bf16.mxu0 0
        %673 = vmatpush1.bf16.msra.mxu0 0
        %674 = vmatprep.subr.bf16.mxu0 0
        %675 = vmatpush1.bf16.msra.mxu0 %v658
        %676 = vmatprep.subr.bf16.mxu0 0
        %677 = vmatpush2.bf16.msra.mxu0 0
        %678 = vmatprep.subr.bf16.mxu0 0
        %679 = vmatpush2.bf16.msra.mxu0 0
        %680 = vmatprep.subr.bf16.mxu0 0
        %681 = vmatpush2.bf16.msra.mxu0 0
        %682 = vmatprep.subr.bf16.mxu0 0
        %683 = vmatpush2.bf16.msra.mxu0 0
        %684 = vmatprep.subr.bf16.mxu0 0
        %685 = vmatpush2.bf16.msra.mxu0 0
        %686 = vmatprep.subr.bf16.mxu0 0
        %687 = vmatpush2.bf16.msra.mxu0 0
        %688 = vmatprep.subr.bf16.mxu0 0
        %689 = vmatpush2.bf16.msra.mxu0 0
        %690 = vmatprep.subr.bf16.mxu0 0
        %691 = vmatpush2.bf16.msra.mxu0 0
        %692 = vmatprep.mubr.bf16.mxu0 0
        %693 = vmatmul.mubr.bf16.gmra.mxu0 %v634
        %v694 = vpop.f32.mrf.mxu0
        %v695 = vadd.f32 0.0, %v694
        %v696 = vpop.f32.mrf.mxu0
        %v697 = vpop.f32.mrf.mxu0
        %v698 = vadd.f32 0.0, %v697
        %v699 = vpop.f32.mrf.mxu0
        %700 = vmatprep.mubr.bf16.mxu0 0
        %701 = vmatmul.mubr.bf16.gmra.mxu0 %v637
        %v702 = vpop.f32.mrf.mxu0
        %v703 = vadd.f32 0.0, %v702
        %v704 = vpop.f32.mrf.mxu0
        %v705 = vpop.f32.mrf.mxu0
        %v706 = vadd.f32 0.0, %v705
        %v707 = vpop.f32.mrf.mxu0
        %708 = vmatprep.mubr.bf16.mxu0 0
        %709 = vmatmul.mubr.bf16.gmra.mxu0 %v640
        %v710 = vpop.f32.mrf.mxu0
        %v711 = vadd.f32 0.0, %v710
        %v712 = vpop.f32.mrf.mxu0
        %v713 = vpop.f32.mrf.mxu0
        %v714 = vadd.f32 0.0, %v713
        %v715 = vpop.f32.mrf.mxu0
        %716 = vmatprep.mubr.bf16.mxu0 0
        %717 = vmatmul.mubr.bf16.gmra.mxu0 %v643
        %v718 = vpop.f32.mrf.mxu0
        %v719 = vadd.f32 0.0, %v718
        %v720 = vpop.f32.mrf.mxu0
        %v721 = vpop.f32.mrf.mxu0
        %v722 = vadd.f32 0.0, %v721
        %v723 = vpop.f32.mrf.mxu0
        %724 = vmatprep.mubr.bf16.mxu0 0
        %725 = vmatmul.mubr.bf16.gmra.mxu0 %v646
        %v726 = vpop.f32.mrf.mxu0
        %v727 = vadd.f32 0.0, %v726
        %v728 = vpop.f32.mrf.mxu0
        %v729 = vpop.f32.mrf.mxu0
        %v730 = vadd.f32 0.0, %v729
        %v731 = vpop.f32.mrf.mxu0
        %732 = vmatprep.mubr.bf16.mxu0 0
        %733 = vmatmul.mubr.bf16.gmra.mxu0 %v649
        %v734 = vpop.f32.mrf.mxu0
        %v735 = vadd.f32 0.0, %v734
        %v736 = vpop.f32.mrf.mxu0
        %v737 = vpop.f32.mrf.mxu0
        %v738 = vadd.f32 0.0, %v737
        %v739 = vpop.f32.mrf.mxu0
        %740 = vmatprep.mubr.bf16.mxu0 0
        %741 = vmatmul.mubr.bf16.gmra.mxu0 %v652
        %v742 = vpop.f32.mrf.mxu0
        %v743 = vadd.f32 0.0, %v742
        %v744 = vpop.f32.mrf.mxu0
        %v745 = vpop.f32.mrf.mxu0
        %v746 = vadd.f32 0.0, %v745
        %v747 = vpop.f32.mrf.mxu0
        %748 = vmatprep.mubr.bf16.mxu0 0
        %749 = vmatmul.mubr.bf16.gmra.mxu0 %v655
        %v750 = vpop.f32.mrf.mxu0
        %v751 = vadd.f32 0.0, %v750
        %v752 = vpop.f32.mrf.mxu0
        %v753 = vpop.f32.mrf.mxu0
        %v754 = vadd.f32 0.0, %v753
        %v755 = vpop.f32.mrf.mxu0
        %756 = vdwg.mxu0
        %v757 = vadd.f32 %v506, %v695
        %v758 = vadd.f32 %v509, %v698
        %v759 = vadd.f32 %v514, %v703
        %v760 = vadd.f32 %v517, %v706
        %v761 = vadd.f32 %v522, %v711
        %v762 = vadd.f32 %v525, %v714
        %v763 = vadd.f32 %v530, %v719
        %v764 = vadd.f32 %v533, %v722
        %v765 = vadd.f32 %v538, %v727
        %v766 = vadd.f32 %v541, %v730
        %v767 = vadd.f32 %v546, %v735
        %v768 = vadd.f32 %v549, %v738
        %v769 = vadd.f32 %v554, %v743
        %v770 = vadd.f32 %v557, %v746
        %v771 = vadd.f32 %v562, %v751
        %v772 = vadd.f32 %v565, %v754
        %v773 = vpack.c.bf16 %v207, %v206
        %v775 = vsel %vm318, %v773, 0
        %v778 = vsel %vm343, %v215, 0
        %780 = vmatprep.subr.bf16.mxu0 0
        %781 = vmatpush1.bf16.msra.mxu0 0
        %782 = vmatprep.subr.bf16.mxu0 0
        %783 = vmatpush1.bf16.msra.mxu0 0
        %784 = vmatprep.subr.bf16.mxu0 0
        %785 = vmatpush1.bf16.msra.mxu0 0
        %786 = vmatprep.subr.bf16.mxu0 0
        %787 = vmatpush1.bf16.msra.mxu0 0
        %788 = vmatprep.subr.bf16.mxu0 0
        %789 = vmatpush1.bf16.msra.mxu0 0
        %790 = vmatprep.subr.bf16.mxu0 0
        %791 = vmatpush1.bf16.msra.mxu0 0
        %792 = vmatprep.subr.bf16.mxu0 0
        %793 = vmatpush1.bf16.msra.mxu0 0
        %794 = vmatprep.subr.bf16.mxu0 0
        %795 = vmatpush1.bf16.msra.mxu0 %v778
        %796 = vmatprep.subr.bf16.mxu0 0
        %797 = vmatpush2.bf16.msra.mxu0 0
        %798 = vmatprep.subr.bf16.mxu0 0
        %799 = vmatpush2.bf16.msra.mxu0 0
        %800 = vmatprep.subr.bf16.mxu0 0
        %801 = vmatpush2.bf16.msra.mxu0 0
        %802 = vmatprep.subr.bf16.mxu0 0
        %803 = vmatpush2.bf16.msra.mxu0 0
        %804 = vmatprep.subr.bf16.mxu0 0
        %805 = vmatpush2.bf16.msra.mxu0 0
        %806 = vmatprep.subr.bf16.mxu0 0
        %807 = vmatpush2.bf16.msra.mxu0 0
        %808 = vmatprep.subr.bf16.mxu0 0
        %809 = vmatpush2.bf16.msra.mxu0 0
        %810 = vmatprep.subr.bf16.mxu0 0
        %811 = vmatpush2.bf16.msra.mxu0 0
        %812 = vmatprep.mubr.bf16.mxu0 0
        %813 = vmatmul.mubr.bf16.gmra.mxu0 %v448
        %v814 = vpop.f32.mrf.mxu0
        %v815 = vadd.f32 0.0, %v814
        %v816 = vpop.f32.mrf.mxu0
        %v817 = vpop.f32.mrf.mxu0
        %v818 = vadd.f32 0.0, %v817
        %v819 = vpop.f32.mrf.mxu0
        %820 = vmatprep.mubr.bf16.mxu0 0
        %821 = vmatmul.mubr.bf16.gmra.mxu0 %v451
        %v822 = vpop.f32.mrf.mxu0
        %v823 = vadd.f32 0.0, %v822
        %v824 = vpop.f32.mrf.mxu0
        %v825 = vpop.f32.mrf.mxu0
        %v826 = vadd.f32 0.0, %v825
        %v827 = vpop.f32.mrf.mxu0
        %828 = vmatprep.mubr.bf16.mxu0 0
        %829 = vmatmul.mubr.bf16.gmra.mxu0 %v454
        %v830 = vpop.f32.mrf.mxu0
        %v831 = vadd.f32 0.0, %v830
        %v832 = vpop.f32.mrf.mxu0
        %v833 = vpop.f32.mrf.mxu0
        %v834 = vadd.f32 0.0, %v833
        %v835 = vpop.f32.mrf.mxu0
        %836 = vmatprep.mubr.bf16.mxu0 0
        %837 = vmatmul.mubr.bf16.gmra.mxu0 %v457
        %v838 = vpop.f32.mrf.mxu0
        %v839 = vadd.f32 0.0, %v838
        %v840 = vpop.f32.mrf.mxu0
        %v841 = vpop.f32.mrf.mxu0
        %v842 = vadd.f32 0.0, %v841
        %v843 = vpop.f32.mrf.mxu0
        %844 = vmatprep.mubr.bf16.mxu0 0
        %845 = vmatmul.mubr.bf16.gmra.mxu0 %v460
        %v846 = vpop.f32.mrf.mxu0
        %v847 = vadd.f32 0.0, %v846
        %v848 = vpop.f32.mrf.mxu0
        %v849 = vpop.f32.mrf.mxu0
        %v850 = vadd.f32 0.0, %v849
        %v851 = vpop.f32.mrf.mxu0
        %852 = vmatprep.mubr.bf16.mxu0 0
        %853 = vmatmul.mubr.bf16.gmra.mxu0 %v463
        %v854 = vpop.f32.mrf.mxu0
        %v855 = vadd.f32 0.0, %v854
        %v856 = vpop.f32.mrf.mxu0
        %v857 = vpop.f32.mrf.mxu0
        %v858 = vadd.f32 0.0, %v857
        %v859 = vpop.f32.mrf.mxu0
        %860 = vmatprep.mubr.bf16.mxu0 0
        %861 = vmatmul.mubr.bf16.gmra.mxu0 %v466
        %v862 = vpop.f32.mrf.mxu0
        %v863 = vadd.f32 0.0, %v862
        %v864 = vpop.f32.mrf.mxu0
        %v865 = vpop.f32.mrf.mxu0
        %v866 = vadd.f32 0.0, %v865
        %v867 = vpop.f32.mrf.mxu0
        %868 = vmatprep.mubr.bf16.mxu0 0
        %869 = vmatmul.mubr.bf16.gmra.mxu0 %v775
        %v870 = vpop.f32.mrf.mxu0
        %v871 = vadd.f32 0.0, %v870
        %v872 = vpop.f32.mrf.mxu0
        %v873 = vpop.f32.mrf.mxu0
        %v874 = vadd.f32 0.0, %v873
        %v875 = vpop.f32.mrf.mxu0
        %876 = vdwg.mxu0
        %v877 = vadd.f32 %v757, %v815
        %v878 = vadd.f32 %v758, %v818
        %v879 = vadd.f32 %v759, %v823
        %v880 = vadd.f32 %v760, %v826
        %v881 = vadd.f32 %v761, %v831
        %v882 = vadd.f32 %v762, %v834
        %v883 = vadd.f32 %v763, %v839
        %v884 = vadd.f32 %v764, %v842
        %v885 = vadd.f32 %v765, %v847
        %v886 = vadd.f32 %v766, %v850
        %v887 = vadd.f32 %v767, %v855
        %v888 = vadd.f32 %v768, %v858
        %v889 = vadd.f32 %v769, %v863
        %v890 = vadd.f32 %v770, %v866
        %v891 = vadd.f32 %v771, %v871
        %v892 = vadd.f32 %v772, %v874
        %v896 = vrot.slane %v206, 1
        %v897 = vrot.slane %v207, 1
        %v898 = vsel %vm253, %v896, %v897
        %v899 = vrot.slane %v208, 1
        %v900 = vsel %vm253, %v897, %v899
        %v903 = vpack.c.bf16 %v900, %v898
        %v905 = vsel %vm318, %v903, 0
        %v908 = vsel %vm343, %v216, 0
        %910 = vmatprep.subr.bf16.mxu0 0
        %911 = vmatpush1.bf16.msra.mxu0 0
        %912 = vmatprep.subr.bf16.mxu0 0
        %913 = vmatpush1.bf16.msra.mxu0 0
        %914 = vmatprep.subr.bf16.mxu0 0
        %915 = vmatpush1.bf16.msra.mxu0 0
        %916 = vmatprep.subr.bf16.mxu0 0
        %917 = vmatpush1.bf16.msra.mxu0 0
        %918 = vmatprep.subr.bf16.mxu0 0
        %919 = vmatpush1.bf16.msra.mxu0 0
        %920 = vmatprep.subr.bf16.mxu0 0
        %921 = vmatpush1.bf16.msra.mxu0 0
        %922 = vmatprep.subr.bf16.mxu0 0
        %923 = vmatpush1.bf16.msra.mxu0 0
        %924 = vmatprep.subr.bf16.mxu0 0
        %925 = vmatpush1.bf16.msra.mxu0 %v908
        %926 = vmatprep.subr.bf16.mxu0 0
        %927 = vmatpush2.bf16.msra.mxu0 0
        %928 = vmatprep.subr.bf16.mxu0 0
        %929 = vmatpush2.bf16.msra.mxu0 0
        %930 = vmatprep.subr.bf16.mxu0 0
        %931 = vmatpush2.bf16.msra.mxu0 0
        %932 = vmatprep.subr.bf16.mxu0 0
        %933 = vmatpush2.bf16.msra.mxu0 0
        %934 = vmatprep.subr.bf16.mxu0 0
        %935 = vmatpush2.bf16.msra.mxu0 0
        %936 = vmatprep.subr.bf16.mxu0 0
        %937 = vmatpush2.bf16.msra.mxu0 0
        %938 = vmatprep.subr.bf16.mxu0 0
        %939 = vmatpush2.bf16.msra.mxu0 0
        %940 = vmatprep.subr.bf16.mxu0 0
        %941 = vmatpush2.bf16.msra.mxu0 0
        %942 = vmatprep.mubr.bf16.mxu0 0
        %943 = vmatmul.mubr.bf16.gmra.mxu0 %v323
        %v944 = vpop.f32.mrf.mxu0
        %v945 = vadd.f32 0.0, %v944
        %v946 = vpop.f32.mrf.mxu0
        %v947 = vpop.f32.mrf.mxu0
        %v948 = vadd.f32 0.0, %v947
        %v949 = vpop.f32.mrf.mxu0
        %950 = vmatprep.mubr.bf16.mxu0 0
        %951 = vmatmul.mubr.bf16.gmra.mxu0 %v326
        %v952 = vpop.f32.mrf.mxu0
        %v953 = vadd.f32 0.0, %v952
        %v954 = vpop.f32.mrf.mxu0
        %v955 = vpop.f32.mrf.mxu0
        %v956 = vadd.f32 0.0, %v955
        %v957 = vpop.f32.mrf.mxu0
        %958 = vmatprep.mubr.bf16.mxu0 0
        %959 = vmatmul.mubr.bf16.gmra.mxu0 %v329
        %v960 = vpop.f32.mrf.mxu0
        %v961 = vadd.f32 0.0, %v960
        %v962 = vpop.f32.mrf.mxu0
        %v963 = vpop.f32.mrf.mxu0
        %v964 = vadd.f32 0.0, %v963
        %v965 = vpop.f32.mrf.mxu0
        %966 = vmatprep.mubr.bf16.mxu0 0
        %967 = vmatmul.mubr.bf16.gmra.mxu0 %v332
        %v968 = vpop.f32.mrf.mxu0
        %v969 = vadd.f32 0.0, %v968
        %v970 = vpop.f32.mrf.mxu0
        %v971 = vpop.f32.mrf.mxu0
        %v972 = vadd.f32 0.0, %v971
        %v973 = vpop.f32.mrf.mxu0
        %974 = vmatprep.mubr.bf16.mxu0 0
        %975 = vmatmul.mubr.bf16.gmra.mxu0 %v335
        %v976 = vpop.f32.mrf.mxu0
        %v977 = vadd.f32 0.0, %v976
        %v978 = vpop.f32.mrf.mxu0
        %v979 = vpop.f32.mrf.mxu0
        %v980 = vadd.f32 0.0, %v979
        %v981 = vpop.f32.mrf.mxu0
        %982 = vmatprep.mubr.bf16.mxu0 0
        %983 = vmatmul.mubr.bf16.gmra.mxu0 %v338
        %v984 = vpop.f32.mrf.mxu0
        %v985 = vadd.f32 0.0, %v984
        %v986 = vpop.f32.mrf.mxu0
        %v987 = vpop.f32.mrf.mxu0
        %v988 = vadd.f32 0.0, %v987
        %v989 = vpop.f32.mrf.mxu0
        %990 = vmatprep.mubr.bf16.mxu0 0
        %991 = vmatmul.mubr.bf16.gmra.mxu0 %v341
        %v992 = vpop.f32.mrf.mxu0
        %v993 = vadd.f32 0.0, %v992
        %v994 = vpop.f32.mrf.mxu0
        %v995 = vpop.f32.mrf.mxu0
        %v996 = vadd.f32 0.0, %v995
        %v997 = vpop.f32.mrf.mxu0
        %998 = vmatprep.mubr.bf16.mxu0 0
        %999 = vmatmul.mubr.bf16.gmra.mxu0 %v905
        %v1000 = vpop.f32.mrf.mxu0
        %v1001 = vadd.f32 0.0, %v1000
        %v1002 = vpop.f32.mrf.mxu0
        %v1003 = vpop.f32.mrf.mxu0
        %v1004 = vadd.f32 0.0, %v1003
        %v1005 = vpop.f32.mrf.mxu0
        %1006 = vdwg.mxu0
        %v1007 = vadd.f32 %v877, %v945
        %v1008 = vadd.f32 %v878, %v948
        %v1009 = vadd.f32 %v879, %v953
        %v1010 = vadd.f32 %v880, %v956
        %v1011 = vadd.f32 %v881, %v961
        %v1012 = vadd.f32 %v882, %v964
        %v1013 = vadd.f32 %v883, %v969
        %v1014 = vadd.f32 %v884, %v972
        %v1015 = vadd.f32 %v885, %v977
        %v1016 = vadd.f32 %v886, %v980
        %v1017 = vadd.f32 %v887, %v985
        %v1018 = vadd.f32 %v888, %v988
        %v1019 = vadd.f32 %v889, %v993
        %v1020 = vadd.f32 %v890, %v996
        %v1021 = vadd.f32 %v891, %v1001
        %v1022 = vadd.f32 %v892, %v1004
        %v1023 = vrot.slane %v206, 2
        %v1024 = vrot.slane %v207, 2
        %v1025 = vsel %vm568, %v1023, %v1024
        %v1026 = vrot.slane %v208, 2
        %v1027 = vsel %vm568, %v1024, %v1026
        %v1030 = vpack.c.bf16 %v1027, %v1025
        %v1032 = vsel %vm318, %v1030, 0
        %v1035 = vsel %vm343, %v217, 0
        %1037 = vmatprep.subr.bf16.mxu0 0
        %1038 = vmatpush1.bf16.msra.mxu0 0
        %1039 = vmatprep.subr.bf16.mxu0 0
        %1040 = vmatpush1.bf16.msra.mxu0 0
        %1041 = vmatprep.subr.bf16.mxu0 0
        %1042 = vmatpush1.bf16.msra.mxu0 0
        %1043 = vmatprep.subr.bf16.mxu0 0
        %1044 = vmatpush1.bf16.msra.mxu0 0
        %1045 = vmatprep.subr.bf16.mxu0 0
        %1046 = vmatpush1.bf16.msra.mxu0 0
        %1047 = vmatprep.subr.bf16.mxu0 0
        %1048 = vmatpush1.bf16.msra.mxu0 0
        %1049 = vmatprep.subr.bf16.mxu0 0
        %1050 = vmatpush1.bf16.msra.mxu0 0
        %1051 = vmatprep.subr.bf16.mxu0 0
        %1052 = vmatpush1.bf16.msra.mxu0 %v1035
        %1053 = vmatprep.subr.bf16.mxu0 0
        %1054 = vmatpush2.bf16.msra.mxu0 0
        %1055 = vmatprep.subr.bf16.mxu0 0
        %1056 = vmatpush2.bf16.msra.mxu0 0
        %1057 = vmatprep.subr.bf16.mxu0 0
        %1058 = vmatpush2.bf16.msra.mxu0 0
        %1059 = vmatprep.subr.bf16.mxu0 0
        %1060 = vmatpush2.bf16.msra.mxu0 0
        %1061 = vmatprep.subr.bf16.mxu0 0
        %1062 = vmatpush2.bf16.msra.mxu0 0
        %1063 = vmatprep.subr.bf16.mxu0 0
        %1064 = vmatpush2.bf16.msra.mxu0 0
        %1065 = vmatprep.subr.bf16.mxu0 0
        %1066 = vmatpush2.bf16.msra.mxu0 0
        %1067 = vmatprep.subr.bf16.mxu0 0
        %1068 = vmatpush2.bf16.msra.mxu0 0
        %1069 = vmatprep.mubr.bf16.mxu0 0
        %1070 = vmatmul.mubr.bf16.gmra.mxu0 %v637
        %v1071 = vpop.f32.mrf.mxu0
        %v1072 = vadd.f32 0.0, %v1071
        %v1073 = vpop.f32.mrf.mxu0
        %v1074 = vpop.f32.mrf.mxu0
        %v1075 = vadd.f32 0.0, %v1074
        %v1076 = vpop.f32.mrf.mxu0
        %1077 = vmatprep.mubr.bf16.mxu0 0
        %1078 = vmatmul.mubr.bf16.gmra.mxu0 %v640
        %v1079 = vpop.f32.mrf.mxu0
        %v1080 = vadd.f32 0.0, %v1079
        %v1081 = vpop.f32.mrf.mxu0
        %v1082 = vpop.f32.mrf.mxu0
        %v1083 = vadd.f32 0.0, %v1082
        %v1084 = vpop.f32.mrf.mxu0
        %1085 = vmatprep.mubr.bf16.mxu0 0
        %1086 = vmatmul.mubr.bf16.gmra.mxu0 %v643
        %v1087 = vpop.f32.mrf.mxu0
        %v1088 = vadd.f32 0.0, %v1087
        %v1089 = vpop.f32.mrf.mxu0
        %v1090 = vpop.f32.mrf.mxu0
        %v1091 = vadd.f32 0.0, %v1090
        %v1092 = vpop.f32.mrf.mxu0
        %1093 = vmatprep.mubr.bf16.mxu0 0
        %1094 = vmatmul.mubr.bf16.gmra.mxu0 %v646
        %v1095 = vpop.f32.mrf.mxu0
        %v1096 = vadd.f32 0.0, %v1095
        %v1097 = vpop.f32.mrf.mxu0
        %v1098 = vpop.f32.mrf.mxu0
        %v1099 = vadd.f32 0.0, %v1098
        %v1100 = vpop.f32.mrf.mxu0
        %1101 = vmatprep.mubr.bf16.mxu0 0
        %1102 = vmatmul.mubr.bf16.gmra.mxu0 %v649
        %v1103 = vpop.f32.mrf.mxu0
        %v1104 = vadd.f32 0.0, %v1103
        %v1105 = vpop.f32.mrf.mxu0
        %v1106 = vpop.f32.mrf.mxu0
        %v1107 = vadd.f32 0.0, %v1106
        %v1108 = vpop.f32.mrf.mxu0
        %1109 = vmatprep.mubr.bf16.mxu0 0
        %1110 = vmatmul.mubr.bf16.gmra.mxu0 %v652
        %v1111 = vpop.f32.mrf.mxu0
        %v1112 = vadd.f32 0.0, %v1111
        %v1113 = vpop.f32.mrf.mxu0
        %v1114 = vpop.f32.mrf.mxu0
        %v1115 = vadd.f32 0.0, %v1114
        %v1116 = vpop.f32.mrf.mxu0
        %1117 = vmatprep.mubr.bf16.mxu0 0
        %1118 = vmatmul.mubr.bf16.gmra.mxu0 %v655
        %v1119 = vpop.f32.mrf.mxu0
        %v1120 = vadd.f32 0.0, %v1119
        %v1121 = vpop.f32.mrf.mxu0
        %v1122 = vpop.f32.mrf.mxu0
        %v1123 = vadd.f32 0.0, %v1122
        %v1124 = vpop.f32.mrf.mxu0
        %1125 = vmatprep.mubr.bf16.mxu0 0
        %1126 = vmatmul.mubr.bf16.gmra.mxu0 %v1032
        %v1127 = vpop.f32.mrf.mxu0
        %v1128 = vadd.f32 0.0, %v1127
        %v1129 = vpop.f32.mrf.mxu0
        %v1130 = vpop.f32.mrf.mxu0
        %v1131 = vadd.f32 0.0, %v1130
        %v1132 = vpop.f32.mrf.mxu0
        %1133 = vdwg.mxu0
        %v1134 = vadd.f32 %v1007, %v1072
        %v1135 = vadd.f32 %v1008, %v1075
        %v1136 = vadd.f32 %v1009, %v1080
        %v1137 = vadd.f32 %v1010, %v1083
        %v1138 = vadd.f32 %v1011, %v1088
        %v1139 = vadd.f32 %v1012, %v1091
        %v1140 = vadd.f32 %v1013, %v1096
        %v1141 = vadd.f32 %v1014, %v1099
        %v1142 = vadd.f32 %v1015, %v1104
        %v1143 = vadd.f32 %v1016, %v1107
        %v1144 = vadd.f32 %v1017, %v1112
        %v1145 = vadd.f32 %v1018, %v1115
        %v1146 = vadd.f32 %v1019, %v1120
        %v1147 = vadd.f32 %v1020, %v1123
        %v1148 = vadd.f32 %v1021, %v1128
        %v1149 = vadd.f32 %v1022, %v1131
        %v1150 = vpack.c.bf16 %v210, %v209
        %v1152 = vsel %vm318, %v1150, 0
        %v1155 = vsel %vm343, %v218, 0
        %1157 = vmatprep.subr.bf16.mxu0 0
        %1158 = vmatpush1.bf16.msra.mxu0 0
        %1159 = vmatprep.subr.bf16.mxu0 0
        %1160 = vmatpush1.bf16.msra.mxu0 0
        %1161 = vmatprep.subr.bf16.mxu0 0
        %1162 = vmatpush1.bf16.msra.mxu0 0
        %1163 = vmatprep.subr.bf16.mxu0 0
        %1164 = vmatpush1.bf16.msra.mxu0 0
        %1165 = vmatprep.subr.bf16.mxu0 0
        %1166 = vmatpush1.bf16.msra.mxu0 0
        %1167 = vmatprep.subr.bf16.mxu0 0
        %1168 = vmatpush1.bf16.msra.mxu0 0
        %1169 = vmatprep.subr.bf16.mxu0 0
        %1170 = vmatpush1.bf16.msra.mxu0 0
        %1171 = vmatprep.subr.bf16.mxu0 0
        %1172 = vmatpush1.bf16.msra.mxu0 %v1155
        %1173 = vmatprep.subr.bf16.mxu0 0
        %1174 = vmatpush2.bf16.msra.mxu0 0
        %1175 = vmatprep.subr.bf16.mxu0 0
        %1176 = vmatpush2.bf16.msra.mxu0 0
        %1177 = vmatprep.subr.bf16.mxu0 0
        %1178 = vmatpush2.bf16.msra.mxu0 0
        %1179 = vmatprep.subr.bf16.mxu0 0
        %1180 = vmatpush2.bf16.msra.mxu0 0
        %1181 = vmatprep.subr.bf16.mxu0 0
        %1182 = vmatpush2.bf16.msra.mxu0 0
        %1183 = vmatprep.subr.bf16.mxu0 0
        %1184 = vmatpush2.bf16.msra.mxu0 0
        %1185 = vmatprep.subr.bf16.mxu0 0
        %1186 = vmatpush2.bf16.msra.mxu0 0
        %1187 = vmatprep.subr.bf16.mxu0 0
        %1188 = vmatpush2.bf16.msra.mxu0 0
        %1189 = vmatprep.mubr.bf16.mxu0 0
        %1190 = vmatmul.mubr.bf16.gmra.mxu0 %v451
        %v1191 = vpop.f32.mrf.mxu0
        %v1192 = vadd.f32 0.0, %v1191
        %v1193 = vpop.f32.mrf.mxu0
        %v1194 = vpop.f32.mrf.mxu0
        %v1195 = vadd.f32 0.0, %v1194
        %v1196 = vpop.f32.mrf.mxu0
        %1197 = vmatprep.mubr.bf16.mxu0 0
        %1198 = vmatmul.mubr.bf16.gmra.mxu0 %v454
        %v1199 = vpop.f32.mrf.mxu0
        %v1200 = vadd.f32 0.0, %v1199
        %v1201 = vpop.f32.mrf.mxu0
        %v1202 = vpop.f32.mrf.mxu0
        %v1203 = vadd.f32 0.0, %v1202
        %v1204 = vpop.f32.mrf.mxu0
        %1205 = vmatprep.mubr.bf16.mxu0 0
        %1206 = vmatmul.mubr.bf16.gmra.mxu0 %v457
        %v1207 = vpop.f32.mrf.mxu0
        %v1208 = vadd.f32 0.0, %v1207
        %v1209 = vpop.f32.mrf.mxu0
        %v1210 = vpop.f32.mrf.mxu0
        %v1211 = vadd.f32 0.0, %v1210
        %v1212 = vpop.f32.mrf.mxu0
        %1213 = vmatprep.mubr.bf16.mxu0 0
        %1214 = vmatmul.mubr.bf16.gmra.mxu0 %v460
        %v1215 = vpop.f32.mrf.mxu0
        %v1216 = vadd.f32 0.0, %v1215
        %v1217 = vpop.f32.mrf.mxu0
        %v1218 = vpop.f32.mrf.mxu0
        %v1219 = vadd.f32 0.0, %v1218
        %v1220 = vpop.f32.mrf.mxu0
        %1221 = vmatprep.mubr.bf16.mxu0 0
        %1222 = vmatmul.mubr.bf16.gmra.mxu0 %v463
        %v1223 = vpop.f32.mrf.mxu0
        %v1224 = vadd.f32 0.0, %v1223
        %v1225 = vpop.f32.mrf.mxu0
        %v1226 = vpop.f32.mrf.mxu0
        %v1227 = vadd.f32 0.0, %v1226
        %v1228 = vpop.f32.mrf.mxu0
        %1229 = vmatprep.mubr.bf16.mxu0 0
        %1230 = vmatmul.mubr.bf16.gmra.mxu0 %v466
        %v1231 = vpop.f32.mrf.mxu0
        %v1232 = vadd.f32 0.0, %v1231
        %v1233 = vpop.f32.mrf.mxu0
        %v1234 = vpop.f32.mrf.mxu0
        %v1235 = vadd.f32 0.0, %v1234
        %v1236 = vpop.f32.mrf.mxu0
        %1237 = vmatprep.mubr.bf16.mxu0 0
        %1238 = vmatmul.mubr.bf16.gmra.mxu0 %v775
        %v1239 = vpop.f32.mrf.mxu0
        %v1240 = vadd.f32 0.0, %v1239
        %v1241 = vpop.f32.mrf.mxu0
        %v1242 = vpop.f32.mrf.mxu0
        %v1243 = vadd.f32 0.0, %v1242
        %v1244 = vpop.f32.mrf.mxu0
        %1245 = vmatprep.mubr.bf16.mxu0 0
        %1246 = vmatmul.mubr.bf16.gmra.mxu0 %v1152
        %v1247 = vpop.f32.mrf.mxu0
        %v1248 = vadd.f32 0.0, %v1247
        %v1249 = vpop.f32.mrf.mxu0
        %v1250 = vpop.f32.mrf.mxu0
        %v1251 = vadd.f32 0.0, %v1250
        %v1252 = vpop.f32.mrf.mxu0
        %1253 = vdwg.mxu0
        %v1254 = vadd.f32 %v1134, %v1192
        %v1255 = vadd.f32 %v1135, %v1195
        %v1256 = vadd.f32 %v1136, %v1200
        %v1257 = vadd.f32 %v1137, %v1203
        %v1258 = vadd.f32 %v1138, %v1208
        %v1259 = vadd.f32 %v1139, %v1211
        %v1260 = vadd.f32 %v1140, %v1216
        %v1261 = vadd.f32 %v1141, %v1219
        %v1262 = vadd.f32 %v1142, %v1224
        %v1263 = vadd.f32 %v1143, %v1227
        %v1264 = vadd.f32 %v1144, %v1232
        %v1265 = vadd.f32 %v1145, %v1235
        %v1266 = vadd.f32 %v1146, %v1240
        %v1267 = vadd.f32 %v1147, %v1243
        %v1268 = vadd.f32 %v1148, %v1248
        %v1269 = vadd.f32 %v1149, %v1251
        %v1273 = vrot.slane %v209, 1
        %v1274 = vrot.slane %v210, 1
        %v1275 = vsel %vm253, %v1273, %v1274
        %v1276 = vrot.slane %v211, 1
        %v1277 = vsel %vm253, %v1274, %v1276
        %v1280 = vpack.c.bf16 %v1277, %v1275
        %v1282 = vsel %vm318, %v1280, 0
        %v1285 = vsel %vm343, %v219, 0
        %1287 = vmatprep.subr.bf16.mxu0 0
        %1288 = vmatpush1.bf16.msra.mxu0 0
        %1289 = vmatprep.subr.bf16.mxu0 0
        %1290 = vmatpush1.bf16.msra.mxu0 0
        %1291 = vmatprep.subr.bf16.mxu0 0
        %1292 = vmatpush1.bf16.msra.mxu0 0
        %1293 = vmatprep.subr.bf16.mxu0 0
        %1294 = vmatpush1.bf16.msra.mxu0 0
        %1295 = vmatprep.subr.bf16.mxu0 0
        %1296 = vmatpush1.bf16.msra.mxu0 0
        %1297 = vmatprep.subr.bf16.mxu0 0
        %1298 = vmatpush1.bf16.msra.mxu0 0
        %1299 = vmatprep.subr.bf16.mxu0 0
        %1300 = vmatpush1.bf16.msra.mxu0 0
        %1301 = vmatprep.subr.bf16.mxu0 0
        %1302 = vmatpush1.bf16.msra.mxu0 %v1285
        %1303 = vmatprep.subr.bf16.mxu0 0
        %1304 = vmatpush2.bf16.msra.mxu0 0
        %1305 = vmatprep.subr.bf16.mxu0 0
        %1306 = vmatpush2.bf16.msra.mxu0 0
        %1307 = vmatprep.subr.bf16.mxu0 0
        %1308 = vmatpush2.bf16.msra.mxu0 0
        %1309 = vmatprep.subr.bf16.mxu0 0
        %1310 = vmatpush2.bf16.msra.mxu0 0
        %1311 = vmatprep.subr.bf16.mxu0 0
        %1312 = vmatpush2.bf16.msra.mxu0 0
        %1313 = vmatprep.subr.bf16.mxu0 0
        %1314 = vmatpush2.bf16.msra.mxu0 0
        %1315 = vmatprep.subr.bf16.mxu0 0
        %1316 = vmatpush2.bf16.msra.mxu0 0
        %1317 = vmatprep.subr.bf16.mxu0 0
        %1318 = vmatpush2.bf16.msra.mxu0 0
        %1319 = vmatprep.mubr.bf16.mxu0 0
        %1320 = vmatmul.mubr.bf16.gmra.mxu0 %v326
        %v1321 = vpop.f32.mrf.mxu0
        %v1322 = vadd.f32 0.0, %v1321
        %v1323 = vpop.f32.mrf.mxu0
        %v1324 = vpop.f32.mrf.mxu0
        %v1325 = vadd.f32 0.0, %v1324
        %v1326 = vpop.f32.mrf.mxu0
        %1327 = vmatprep.mubr.bf16.mxu0 0
        %1328 = vmatmul.mubr.bf16.gmra.mxu0 %v329
        %v1329 = vpop.f32.mrf.mxu0
        %v1330 = vadd.f32 0.0, %v1329
        %v1331 = vpop.f32.mrf.mxu0
        %v1332 = vpop.f32.mrf.mxu0
        %v1333 = vadd.f32 0.0, %v1332
        %v1334 = vpop.f32.mrf.mxu0
        %1335 = vmatprep.mubr.bf16.mxu0 0
        %1336 = vmatmul.mubr.bf16.gmra.mxu0 %v332
        %v1337 = vpop.f32.mrf.mxu0
        %v1338 = vadd.f32 0.0, %v1337
        %v1339 = vpop.f32.mrf.mxu0
        %v1340 = vpop.f32.mrf.mxu0
        %v1341 = vadd.f32 0.0, %v1340
        %v1342 = vpop.f32.mrf.mxu0
        %1343 = vmatprep.mubr.bf16.mxu0 0
        %1344 = vmatmul.mubr.bf16.gmra.mxu0 %v335
        %v1345 = vpop.f32.mrf.mxu0
        %v1346 = vadd.f32 0.0, %v1345
        %v1347 = vpop.f32.mrf.mxu0
        %v1348 = vpop.f32.mrf.mxu0
        %v1349 = vadd.f32 0.0, %v1348
        %v1350 = vpop.f32.mrf.mxu0
        %1351 = vmatprep.mubr.bf16.mxu0 0
        %1352 = vmatmul.mubr.bf16.gmra.mxu0 %v338
        %v1353 = vpop.f32.mrf.mxu0
        %v1354 = vadd.f32 0.0, %v1353
        %v1355 = vpop.f32.mrf.mxu0
        %v1356 = vpop.f32.mrf.mxu0
        %v1357 = vadd.f32 0.0, %v1356
        %v1358 = vpop.f32.mrf.mxu0
        %1359 = vmatprep.mubr.bf16.mxu0 0
        %1360 = vmatmul.mubr.bf16.gmra.mxu0 %v341
        %v1361 = vpop.f32.mrf.mxu0
        %v1362 = vadd.f32 0.0, %v1361
        %v1363 = vpop.f32.mrf.mxu0
        %v1364 = vpop.f32.mrf.mxu0
        %v1365 = vadd.f32 0.0, %v1364
        %v1366 = vpop.f32.mrf.mxu0
        %1367 = vmatprep.mubr.bf16.mxu0 0
        %1368 = vmatmul.mubr.bf16.gmra.mxu0 %v905
        %v1369 = vpop.f32.mrf.mxu0
        %v1370 = vadd.f32 0.0, %v1369
        %v1371 = vpop.f32.mrf.mxu0
        %v1372 = vpop.f32.mrf.mxu0
        %v1373 = vadd.f32 0.0, %v1372
        %v1374 = vpop.f32.mrf.mxu0
        %1375 = vmatprep.mubr.bf16.mxu0 0
        %1376 = vmatmul.mubr.bf16.gmra.mxu0 %v1282
        %v1377 = vpop.f32.mrf.mxu0
        %v1378 = vadd.f32 0.0, %v1377
        %v1379 = vpop.f32.mrf.mxu0
        %v1380 = vpop.f32.mrf.mxu0
        %v1381 = vadd.f32 0.0, %v1380
        %v1382 = vpop.f32.mrf.mxu0
        %1383 = vdwg.mxu0
        %v1384 = vadd.f32 %v1254, %v1322
        %v1385 = vadd.f32 %v1255, %v1325
        %v1386 = vadd.f32 %v1256, %v1330
        %v1387 = vadd.f32 %v1257, %v1333
        %v1388 = vadd.f32 %v1258, %v1338
        %v1389 = vadd.f32 %v1259, %v1341
        %v1390 = vadd.f32 %v1260, %v1346
        %v1391 = vadd.f32 %v1261, %v1349
        %v1392 = vadd.f32 %v1262, %v1354
        %v1393 = vadd.f32 %v1263, %v1357
        %v1394 = vadd.f32 %v1264, %v1362
        %v1395 = vadd.f32 %v1265, %v1365
        %v1396 = vadd.f32 %v1266, %v1370
        %v1397 = vadd.f32 %v1267, %v1373
        %v1398 = vadd.f32 %v1268, %v1378
        %v1399 = vadd.f32 %v1269, %v1381
        %v1400 = vrot.slane %v209, 2
        %v1401 = vrot.slane %v210, 2
        %v1402 = vsel %vm568, %v1400, %v1401
        %v1403 = vrot.slane %v211, 2
        %v1404 = vsel %vm568, %v1401, %v1403
        %v1407 = vpack.c.bf16 %v1404, %v1402
        %v1409 = vsel %vm318, %v1407, 0
        %v1412 = vsel %vm343, %v220, 0
        %1414 = vmatprep.subr.bf16.mxu0 0
        %1415 = vmatpush1.bf16.msra.mxu0 0
        %1416 = vmatprep.subr.bf16.mxu0 0
        %1417 = vmatpush1.bf16.msra.mxu0 0
        %1418 = vmatprep.subr.bf16.mxu0 0
        %1419 = vmatpush1.bf16.msra.mxu0 0
        %1420 = vmatprep.subr.bf16.mxu0 0
        %1421 = vmatpush1.bf16.msra.mxu0 0
        %1422 = vmatprep.subr.bf16.mxu0 0
        %1423 = vmatpush1.bf16.msra.mxu0 0
        %1424 = vmatprep.subr.bf16.mxu0 0
        %1425 = vmatpush1.bf16.msra.mxu0 0
        %1426 = vmatprep.subr.bf16.mxu0 0
        %1427 = vmatpush1.bf16.msra.mxu0 0
        %1428 = vmatprep.subr.bf16.mxu0 0
        %1429 = vmatpush1.bf16.msra.mxu0 %v1412
        %1430 = vmatprep.subr.bf16.mxu0 0
        %1431 = vmatpush2.bf16.msra.mxu0 0
        %1432 = vmatprep.subr.bf16.mxu0 0
        %1433 = vmatpush2.bf16.msra.mxu0 0
        %1434 = vmatprep.subr.bf16.mxu0 0
        %1435 = vmatpush2.bf16.msra.mxu0 0
        %1436 = vmatprep.subr.bf16.mxu0 0
        %1437 = vmatpush2.bf16.msra.mxu0 0
        %1438 = vmatprep.subr.bf16.mxu0 0
        %1439 = vmatpush2.bf16.msra.mxu0 0
        %1440 = vmatprep.subr.bf16.mxu0 0
        %1441 = vmatpush2.bf16.msra.mxu0 0
        %1442 = vmatprep.subr.bf16.mxu0 0
        %1443 = vmatpush2.bf16.msra.mxu0 0
        %1444 = vmatprep.subr.bf16.mxu0 0
        %1445 = vmatpush2.bf16.msra.mxu0 0
        %1446 = vmatprep.mubr.bf16.mxu0 0
        %1447 = vmatmul.mubr.bf16.gmra.mxu0 %v640
        %v1448 = vpop.f32.mrf.mxu0
        %v1449 = vadd.f32 0.0, %v1448
        %v1450 = vpop.f32.mrf.mxu0
        %v1451 = vpop.f32.mrf.mxu0
        %v1452 = vadd.f32 0.0, %v1451
        %v1453 = vpop.f32.mrf.mxu0
        %1454 = vmatprep.mubr.bf16.mxu0 0
        %1455 = vmatmul.mubr.bf16.gmra.mxu0 %v643
        %v1456 = vpop.f32.mrf.mxu0
        %v1457 = vadd.f32 0.0, %v1456
        %v1458 = vpop.f32.mrf.mxu0
        %v1459 = vpop.f32.mrf.mxu0
        %v1460 = vadd.f32 0.0, %v1459
        %v1461 = vpop.f32.mrf.mxu0
        %1462 = vmatprep.mubr.bf16.mxu0 0
        %1463 = vmatmul.mubr.bf16.gmra.mxu0 %v646
        %v1464 = vpop.f32.mrf.mxu0
        %v1465 = vadd.f32 0.0, %v1464
        %v1466 = vpop.f32.mrf.mxu0
        %v1467 = vpop.f32.mrf.mxu0
        %v1468 = vadd.f32 0.0, %v1467
        %v1469 = vpop.f32.mrf.mxu0
        %1470 = vmatprep.mubr.bf16.mxu0 0
        %1471 = vmatmul.mubr.bf16.gmra.mxu0 %v649
        %v1472 = vpop.f32.mrf.mxu0
        %v1473 = vadd.f32 0.0, %v1472
        %v1474 = vpop.f32.mrf.mxu0
        %v1475 = vpop.f32.mrf.mxu0
        %v1476 = vadd.f32 0.0, %v1475
        %v1477 = vpop.f32.mrf.mxu0
        %1478 = vmatprep.mubr.bf16.mxu0 0
        %1479 = vmatmul.mubr.bf16.gmra.mxu0 %v652
        %v1480 = vpop.f32.mrf.mxu0
        %v1481 = vadd.f32 0.0, %v1480
        %v1482 = vpop.f32.mrf.mxu0
        %v1483 = vpop.f32.mrf.mxu0
        %v1484 = vadd.f32 0.0, %v1483
        %v1485 = vpop.f32.mrf.mxu0
        %1486 = vmatprep.mubr.bf16.mxu0 0
        %1487 = vmatmul.mubr.bf16.gmra.mxu0 %v655
        %v1488 = vpop.f32.mrf.mxu0
        %v1489 = vadd.f32 0.0, %v1488
        %v1490 = vpop.f32.mrf.mxu0
        %v1491 = vpop.f32.mrf.mxu0
        %v1492 = vadd.f32 0.0, %v1491
        %v1493 = vpop.f32.mrf.mxu0
        %1494 = vmatprep.mubr.bf16.mxu0 0
        %1495 = vmatmul.mubr.bf16.gmra.mxu0 %v1032
        %v1496 = vpop.f32.mrf.mxu0
        %v1497 = vadd.f32 0.0, %v1496
        %v1498 = vpop.f32.mrf.mxu0
        %v1499 = vpop.f32.mrf.mxu0
        %v1500 = vadd.f32 0.0, %v1499
        %v1501 = vpop.f32.mrf.mxu0
        %1502 = vmatprep.mubr.bf16.mxu0 0
        %1503 = vmatmul.mubr.bf16.gmra.mxu0 %v1409
        %v1504 = vpop.f32.mrf.mxu0
        %v1505 = vadd.f32 0.0, %v1504
        %v1506 = vpop.f32.mrf.mxu0
        %v1507 = vpop.f32.mrf.mxu0
        %v1508 = vadd.f32 0.0, %v1507
        %v1509 = vpop.f32.mrf.mxu0
        %1510 = vdwg.mxu0
        %v1511 = vadd.f32 %v1384, %v1449
        %v1512 = vadd.f32 %v1385, %v1452
        %v1513 = vadd.f32 %v1386, %v1457
        %v1514 = vadd.f32 %v1387, %v1460
        %v1515 = vadd.f32 %v1388, %v1465
        %v1516 = vadd.f32 %v1389, %v1468
        %v1517 = vadd.f32 %v1390, %v1473
        %v1518 = vadd.f32 %v1391, %v1476
        %v1519 = vadd.f32 %v1392, %v1481
        %v1520 = vadd.f32 %v1393, %v1484
        %v1521 = vadd.f32 %v1394, %v1489
        %v1522 = vadd.f32 %v1395, %v1492
        %v1523 = vadd.f32 %v1396, %v1497
        %v1524 = vadd.f32 %v1397, %v1500
        %v1525 = vadd.f32 %v1398, %v1505
        %v1526 = vadd.f32 %v1399, %v1508
        %1527 = vst [vmem:[%s167] sm:$0xff] %v1511
        %1528 = vst [vmem:[%s167 + $0x8] sm:$0xff] %v1512
        %1529 = vst [vmem:[%s167 + $0x10] sm:$0xff] %v1513
        %1530 = vst [vmem:[%s167 + $0x18] sm:$0xff] %v1514
        %1531 = vst [vmem:[%s167 + $0x20] sm:$0xff] %v1515
        %1532 = vst [vmem:[%s167 + $0x28] sm:$0xff] %v1516
        %1533 = vst [vmem:[%s167 + $0x30] sm:$0xff] %v1517
        %1534 = vst [vmem:[%s167 + $0x38] sm:$0xff] %v1518
        %1535 = vst [vmem:[%s167 + $0x40] sm:$0xff] %v1519
        %1536 = vst [vmem:[%s167 + $0x48] sm:$0xff] %v1520
        %1537 = vst [vmem:[%s167 + $0x50] sm:$0xff] %v1521
        %1538 = vst [vmem:[%s167 + $0x58] sm:$0xff] %v1522
        %1539 = vst [vmem:[%s167 + $0x60] sm:$0xff] %v1523
        %1540 = vst [vmem:[%s167 + $0x68] sm:$0xff] %v1524
        %1541 = vst [vmem:[%s167 + $0x70] sm:$0xff] %v1525
        %1542 = vst [vmem:[%s167 + $0x78] sm:$0xff] %v1526
        %v1543 = vadd.f32 %v1511, %v1512
        %v1544 = vadd.f32 %v1543, %v1513
        %v1545 = vadd.f32 %v1544, %v1514
        %v1546 = vadd.f32 %v1545, %v1515
        %v1547 = vadd.f32 %v1546, %v1516
        %v1548 = vadd.f32 %v1547, %v1517
        %v1549 = vadd.f32 %v1548, %v1518
        %v1550 = vadd.f32 %v1549, %v1519
        %v1551 = vadd.f32 %v1550, %v1520
        %v1552 = vadd.f32 %v1551, %v1521
        %v1553 = vadd.f32 %v1552, %v1522
        %v1554 = vadd.f32 %v1553, %v1523
        %v1555 = vadd.f32 %v1554, %v1524
        %v1556 = vadd.f32 %v1555, %v1525
        %v1557 = vadd.f32 %v1556, %v1526
        %v1558 = vrot.slane %v1557, 4
        %v1559 = vadd.f32 %v1557, %v1558
        %v1560 = vrot.slane %v1559, 2
        %v1561 = vadd.f32 %v1559, %v1560
        %v1562 = vrot.slane %v1561, 1
        %v1563 = vadd.f32 %v1561, %v1562
        %v1564 = vmul.f32 %v1511, %v1511
        %v1565 = vmul.f32 %v1512, %v1512
        %v1566 = vmul.f32 %v1513, %v1513
        %v1567 = vmul.f32 %v1514, %v1514
        %v1568 = vmul.f32 %v1515, %v1515
        %v1569 = vmul.f32 %v1516, %v1516
        %v1570 = vmul.f32 %v1517, %v1517
        %v1571 = vmul.f32 %v1518, %v1518
        %v1572 = vmul.f32 %v1519, %v1519
        %v1573 = vmul.f32 %v1520, %v1520
        %v1574 = vmul.f32 %v1521, %v1521
        %v1575 = vmul.f32 %v1522, %v1522
        %v1576 = vmul.f32 %v1523, %v1523
        %v1577 = vmul.f32 %v1524, %v1524
        %v1578 = vmul.f32 %v1525, %v1525
        %v1579 = vmul.f32 %v1526, %v1526
        %v1580 = vadd.f32 %v1564, %v1565
        %v1581 = vadd.f32 %v1580, %v1566
        %v1582 = vadd.f32 %v1581, %v1567
        %v1583 = vadd.f32 %v1582, %v1568
        %v1584 = vadd.f32 %v1583, %v1569
        %v1585 = vadd.f32 %v1584, %v1570
        %v1586 = vadd.f32 %v1585, %v1571
        %v1587 = vadd.f32 %v1586, %v1572
        %v1588 = vadd.f32 %v1587, %v1573
        %v1589 = vadd.f32 %v1588, %v1574
        %v1590 = vadd.f32 %v1589, %v1575
        %v1591 = vadd.f32 %v1590, %v1576
        %v1592 = vadd.f32 %v1591, %v1577
        %v1593 = vadd.f32 %v1592, %v1578
        %v1594 = vadd.f32 %v1593, %v1579
        %v1595 = vrot.slane %v1594, 4
        %v1596 = vadd.f32 %v1594, %v1595
        %v1597 = vrot.slane %v1596, 2
        %v1598 = vadd.f32 %v1596, %v1597
        %v1599 = vrot.slane %v1598, 1
        %v1600 = vadd.f32 %v1598, %v1599
        %vm1601 = vcmask 1040384
        %v1602 = vsel %vm1601, %v1563, %v1600
        %1603 = vst [vmem:[%s174] sm:$0x3] %v1602
        %s1604 = sand.u32 %s76, 1
        %s1605 = scalar_lea.sflag [#allocation3], %s1604
        %s1606 = sand.u32 %s76, 1
        %s1607 = smul.addr %s1606, 128
        %s1608 = scalar_lea.vmem [#allocation2], %s1607
        %s1609 = sand.u32 %s102, 1
        %s1610 = scalar_lea.sflag [#allocation5], %s1609
        %s1611 = sand.u32 %s102, 1
        %s1612 = smul.addr %s1611, 2
        %s1613 = scalar_lea.vmem [#allocation4], %s1612
        // Predicated region
        $region29: #{tpu_custom_call.1} parent=27 // pred_check
          %p1614 = pneg %p86
        $region30: #{tpu_custom_call.1} parent=27 // pred_check_branch
          %1616 = sbr.rel (%p1614) target = $region32
        $region31: #{tpu_custom_call.1} parent=27 // pred_region
          %s1617 = smul.u32 16, %s21
          %s1619 = ssub.s32 2048, 2048
          %1620 = vsyncadd %s1605, %s1619
          %s1621 = smul.addr %s1617, 128
          %s1622 = scalar_lea.hbm %s2, %s1621
          %s1623 = sshll.u32 %s1608, 4
          %s1624 = int_to_ptr.vmem [resolvable:$true] %s1623
          %1629 = dma.vmem_to_hbm [thread:$0]  %s1624, 2048, %s1622, %s1605, 128, 128, 8
        $region32: #{tpu_custom_call.1} parent=27 // pred_fallthru
          _
        // Predicated region
        $region33: #{tpu_custom_call.1} parent=27 // pred_check
          %p1630 = pneg %p112
        $region34: #{tpu_custom_call.1} parent=27 // pred_check_branch
          %1632 = sbr.rel (%p1630) target = $region36
        $region35: #{tpu_custom_call.1} parent=27 // pred_region
          %s1634 = ssub.s32 32, 32
          %1635 = vsyncadd %s1610, %s1634
          %s1636 = smul.addr %s21, 32
          %s1637 = scalar_lea.hbm %s3, %s1636
          %s1639 = sshll.u32 %s1613, 4
          %s1640 = int_to_ptr.vmem [resolvable:$true] %s1639
          %1642 = dma.vmem_to_hbm [thread:$0]  %s1640, 32, %s1637, %s1610
        $region36: #{tpu_custom_call.1} parent=27 // pred_fallthru
          _
      $region28: #{tpu_custom_call.1} parent=5 // pred_fallthru
        _
      %p1643 = scmp.le.s32.totalorder 2, %s16
      // Predicated region
      $region37: #{tpu_custom_call.1} parent=5 // pred_check
        %p1644 = pneg %p1643
      $region38: #{tpu_custom_call.1} parent=5 // pred_check_branch
        %1646 = sbr.rel (%p1644) target = $region40
      $region39: #{tpu_custom_call.1} parent=5 // pred_region
        %s1647 = ssub.s32 %s16, 2
        // Predicated region
        $region41: #{tpu_custom_call.1} parent=39 // pred_check
          %p1648 = pneg %p92
        $region42: #{tpu_custom_call.1} parent=39 // pred_check_branch
          %1650 = sbr.rel (%p1648) target = $region44
        $region43: #{tpu_custom_call.1} parent=39 // pred_region
          %s1651 = sand.u32 %s77, 1
          %s1652 = scalar_lea.sflag [#allocation3], %s1651
          %s1653 = sand.u32 %s77, 1
          %s1654 = smul.addr %s1653, 128
          %s1655 = scalar_lea.vmem [#allocation2], %s1654
          %1656 = dma.done %s1652, 2048
        $region44: #{tpu_custom_call.1} parent=39 // pred_fallthru
          _
        // Predicated region
        $region45: #{tpu_custom_call.1} parent=39 // pred_check
          %p1657 = pneg %p118
        $region46: #{tpu_custom_call.1} parent=39 // pred_check_branch
          %1659 = sbr.rel (%p1657) target = $region48
        $region47: #{tpu_custom_call.1} parent=39 // pred_region
          %s1660 = sand.u32 %s103, 1
          %s1661 = scalar_lea.sflag [#allocation5], %s1660
          %s1662 = sand.u32 %s103, 1
          %s1663 = smul.addr %s1662, 2
          %s1664 = scalar_lea.vmem [#allocation4], %s1663
          %1665 = dma.done %s1661, 32
        $region48: #{tpu_custom_call.1} parent=39 // pred_fallthru
          _
      $region40: #{tpu_custom_call.1} parent=5 // pred_fallthru
        _
    $region6: #{tpu_custom_call.1} parent=1 // loop_footer
      %s20 = sadd.s32 1, %s16
    $region7: #{tpu_custom_call.1} parent=1 // loop_footer_branch
      %15 = sbr.rel target = $region3
    $region8: #{tpu_custom_call.1} parent=1 // loop_exit
      _
    %1666 = vsyncpa [#allocation3], 1
    %s1667 = scalar_lea.sflag [#allocation3], 1
    %1668 = vsyncpa %s1667, 1
    %1669 = vsyncpa [#allocation5], 1
    %s1670 = scalar_lea.sflag [#allocation5], 1
    %1671 = vsyncpa %s1670, 1

</llo_original>
